<compile_context>
chip_gen: v7x
topology: tpu7x:2x2x1
jax: 0.10.0
libtpu: 0.0.40
codegen_flags: <defaults>
</compile_context>

<pallas_src>
import functools

import numpy as np
import jax
import jax.numpy as jnp
from jax import lax
from jax.experimental import pallas as pl
from jax.experimental.pallas import tpu as pltpu

LANE = 128


def _round_up(n, m):
    return ((n + m - 1) // m) * m


def _pick_time_block(t):
    """Timesteps per grid step (feedback: ~8-16 amortizes grid overhead)."""
    for tt in (8, 16, 4, 2):
        if t % tt == 0:
            return tt
    return 1


def _pick_row_tile(n):
    """Row tile for the batched output stage (multiple of 16 for bf16 rows)."""
    for rt in (512, 256, 128, 64, 32, 16):
        if n % rt == 0:
            return rt
    return n  # single full block


# --------------------------------------------------------------------------
# Kernel 1: serial leaky-reservoir recurrence (time-blocked, hidden carry).
# --------------------------------------------------------------------------
def esn_recurrent_kernel(u_ref, h0_ref, w_hid_ref, hseq_ref, hcarry_ref, *,
                         alpha, tt):
    """One time block of the recurrence.

    u_ref:      (TT, BT, R) bf16  precomputed x_t @ w_in.T (streamed per block)
    h0_ref:     (BT, R)     f32   initial hidden state (read only at t == 0)
    w_hid_ref:  (R, R)      bf16  w_hidden.T, VMEM-resident (constant index map)
    hseq_ref:   (TT, BT, R) bf16  per-step hidden states (for the output stage)
    hcarry_ref: (BT, R)     f32   hidden state carried across time blocks
    """
    tb = pl.program_id(1)   # time-block index ("arbitrary" axis)

    @pl.when(tb == 0)
    def _():
        hcarry_ref[...] = h0_ref[...]

    def step(i, h):
        # pre = (w_in @ x_t.T + w_hidden @ h.T).T  ==  u_t + h @ w_hidden.T
        pre = u_ref[i].astype(jnp.float32) + jnp.dot(
            h.astype(w_hid_ref.dtype), w_hid_ref[...],
            preferred_element_type=jnp.float32)
        h_new = (1.0 - alpha) * h + alpha * jnp.tanh(pre)
        hseq_ref[i] = h_new.astype(hseq_ref.dtype)
        return h_new

    # Unrolled inner time loop (LLO gets the whole block to schedule/overlap).
    hcarry_ref[...] = lax.fori_loop(0, tt, step, hcarry_ref[...], unroll=True)


# --------------------------------------------------------------------------
# Kernel 2: batched output projection + softmax (fully parallel over rows).
# --------------------------------------------------------------------------
def esn_output_kernel(hseq_ref, xlog_ref, w_out_h_ref, y_ref):
    """logits = (bias + x @ w_out_x) + h @ w_out_h ; softmax over padded O.

    hseq_ref:    (RT, R)     bf16   hidden states (rows = flattened (t, b))
    xlog_ref:    (RT, O_pad) f32    precomputed bias + x-part of the logits
                                    (padded O columns carry -1e30, kept f32)
    w_out_h_ref: (R, O_pad)  bf16   hidden rows of w_out, VMEM resident
    y_ref:       (RT, O_pad) f32    softmax output (lane-dense stores)
    """
    logits = xlog_ref[...] + jnp.dot(hseq_ref[...], w_out_h_ref[...],
                                     preferred_element_type=jnp.float32)
    m = jnp.max(logits, axis=-1, keepdims=True)
    e = jnp.exp(logits - m)
    # approx reciprocal (EUP): rows sum to 1 only to ~2^-12.
    inv = pl.reciprocal(jnp.sum(e, axis=-1, keepdims=True), approx=True)
    y_ref[...] = e * inv


# --------------------------------------------------------------------------
# Wrapper
# --------------------------------------------------------------------------
@functools.partial(jax.jit, static_argnames=("alpha", "weights_dtype"))
def esn_forward_seq(x_seq, hidden, w_in, w_hidden, w_out, *, alpha,
                    weights_dtype=jnp.bfloat16):
    """Run the ESN over a whole sequence.

    x_seq: (T, B, I)   hidden: (B, R)
    w_in: (R, I)   w_hidden: (R, R)   w_out: (1 + I + R, O)
    Returns (y_seq (T, B, O), final_hidden (B, R)).
    alpha is static (baked into the kernel); changing it retraces.
    """
    T, B, I = x_seq.shape
    R = hidden.shape[1]
    O = w_out.shape[1]
    f32 = jnp.float32
    wq = weights_dtype
    wb = jnp.dtype(wq).itemsize

    # TODO(synk): on v6e/v7x a 256-wide MXU prefers R_pad / O_pad multiples of
    # 256; we only enforce lane (128) alignment here.
    R_pad = _round_up(R, LANE)
    O_pad = _round_up(max(O, 1), LANE)

    TT = _pick_time_block(T)
    NT = T // TT

    # Batch tiling: split into 2 tiles (second v7x TensorCore) only when it
    # stays a comfortable multiple of 16 sublanes; otherwise one full tile.
    BT = B // 2 if (B % 32 == 0) else B
    NB = B // BT

    # ---------------- hoisted non-recurrent projections (plain XLA) ----------
    x2 = x_seq.reshape(T * B, I).astype(wq)                       # (T*B, I)

    w_in_t = jnp.zeros((I, R_pad), f32).at[:, :R].set(w_in.T.astype(f32)).astype(wq)
    # Projected input stream, bf16 (halves per-step DMA; mirrored in reference).
    u = jnp.dot(x2, w_in_t, preferred_element_type=f32).astype(wq)
    u = u.reshape(T, B, R_pad)

    w_out_x = jnp.zeros((I, O_pad), f32).at[:, :O].set(
        w_out[1:1 + I, :].astype(f32)).astype(wq)
    # Bias row: padded O columns get -1e30 (kept in f32!) so exp -> exactly 0.
    bias_row = jnp.full((1, O_pad), -1e30, f32).at[:, :O].set(
        w_out[0:1, :].astype(f32))
    xlog = bias_row + jnp.dot(x2, w_out_x, preferred_element_type=f32)  # (T*B, O_pad) f32

    # ---------------- recurrent weights / state (zero-padded) ----------------
    # Padded hidden columns stay exactly 0 through the recurrence (padded w_in
    # columns, w_hidden rows/cols and h0 columns are all zero).
    w_hid_t = jnp.zeros((R_pad, R_pad), f32).at[:R, :R].set(
        w_hidden.T.astype(f32)).astype(wq)
    h0 = jnp.zeros((B, R_pad), f32).at[:, :R].set(hidden.astype(f32))

    w_out_h = jnp.zeros((R_pad, O_pad), f32).at[:R, :O].set(
        w_out[1 + I:, :].astype(f32)).astype(wq)

    # ---------------- compiler hints -----------------------------------------
    # Generation-aware VMEM cap: leave 16 MiB headroom (v7x only has 64 MiB).
    try:
        vmem_cap = int(pltpu.get_tpu_info().vmem_capacity_bytes)
    except Exception:
        vmem_cap = 64 * 2**20
    rec_bytes = (R_pad * R_pad * wb * 2            # w_hidden.T (default 2x buffered)
                 + 2 * TT * BT * R_pad * wb * 2    # u + hseq blocks, double-buffered
                 + 2 * BT * R_pad * 4 * 2)         # h0 + hidden carry
    vmem_limit = int(min(vmem_cap - 16 * 2**20, max(32 * 2**20, 2 * rec_bytes)))

    rec_cost = pl.CostEstimate(
        flops=2 * T * B * R_pad * R_pad,
        transcendentals=T * B * R_pad,
        bytes_accessed=int(2 * T * B * R_pad * wb + R_pad * R_pad * wb
                           + 2 * B * R_pad * 4),
    )
    out_cost = pl.CostEstimate(
        flops=2 * T * B * R_pad * O_pad,
        transcendentals=T * B * O_pad,
        bytes_accessed=int(T * B * R_pad * wb + 2 * T * B * O_pad * 4
                           + R_pad * O_pad * wb),
    )

    # ---------------- stage 1: recurrent kernel ------------------------------
    # TODO(synk): pipeline_mode=pl.Buffered(1) on the constant w_hidden block
    # would avoid double-buffering it in VMEM for very large reservoirs (v7x).
    hseq, h_final_pad = pl.pallas_call(
        functools.partial(esn_recurrent_kernel, alpha=float(alpha), tt=TT),
        grid_spec=pltpu.PrefetchScalarGridSpec(
            num_scalar_prefetch=0,
            grid=(NB, NT),
            in_specs=[
                pl.BlockSpec((TT, BT, R_pad), lambda b, t: (t, b, 0)),  # u (bf16 stream)
                pl.BlockSpec((BT, R_pad), lambda b, t: (b, 0)),         # initial hidden
                pl.BlockSpec((R_pad, R_pad), lambda b, t: (0, 0)),      # w_hidden.T resident
            ],
            out_specs=(
                pl.BlockSpec((TT, BT, R_pad), lambda b, t: (t, b, 0)),  # h_t sequence
                pl.BlockSpec((BT, R_pad), lambda b, t: (b, 0)),         # hidden carry
            ),
        ),
        out_shape=(
            jax.ShapeDtypeStruct((T, B, R_pad), wq),
            jax.ShapeDtypeStruct((B, R_pad), f32),
        ),
        compiler_params=pltpu.CompilerParams(
            dimension_semantics=("parallel", "arbitrary"),
            vmem_limit_bytes=vmem_limit,
        ),
        cost_estimate=rec_cost,
    )(u, h0, w_hid_t)

    # ---------------- stage 2: batched output projection + softmax -----------
    rows = T * B
    RT = _pick_row_tile(rows)
    NR = rows // RT

    y2 = pl.pallas_call(
        esn_output_kernel,
        grid_spec=pltpu.PrefetchScalarGridSpec(
            num_scalar_prefetch=0,
            grid=(NR,),
            in_specs=[
                pl.BlockSpec((RT, R_pad), lambda r: (r, 0)),     # h rows (bf16)
                pl.BlockSpec((RT, O_pad), lambda r: (r, 0)),     # bias + x-part (f32)
                pl.BlockSpec((R_pad, O_pad), lambda r: (0, 0)),  # w_out_h resident
            ],
            out_specs=pl.BlockSpec((RT, O_pad), lambda r: (r, 0)),
        ),
        out_shape=jax.ShapeDtypeStruct((rows, O_pad), f32),
        compiler_params=pltpu.CompilerParams(
            dimension_semantics=("parallel",),
            vmem_limit_bytes=vmem_limit,
        ),
        cost_estimate=out_cost,
    )(hseq.reshape(rows, R_pad), xlog, w_out_h)

    y = y2.reshape(T, B, O_pad)[:, :, :O]
    return y, h_final_pad[:, :R]


# --------------------------------------------------------------------------
# Parameter construction + pure-JAX reference
# --------------------------------------------------------------------------
def init_esn_params(key, input_size, reservoir_size, output_size,
                    sparse_degree=0.5, spectral_radius=0.95):
    """Deterministic re-implementation of ESN.__init__ parameter construction."""
    k_in, k_hid, k_mask, k_out = jax.random.split(key, 4)

    w_in = jax.random.normal(k_in, (reservoir_size, input_size), dtype=jnp.float32)

    w_hidden = jax.random.normal(k_hid, (reservoir_size, reservoir_size),
                                 dtype=jnp.float32)
    mask = (jax.random.uniform(k_mask, (reservoir_size, reservoir_size))
            <= sparse_degree)
    w_hidden = w_hidden * mask.astype(jnp.float32)

    # TODO(synk): non-symmetric eigendecomposition (torch.eig) has no Pallas/TPU
    # equivalent; the spectral-radius scaling is done once at init on the host.
    max_eigval = float(np.abs(np.linalg.eigvals(np.asarray(w_hidden))).max())
    w_hidden = w_hidden * (spectral_radius / max_eigval)

    w_out = jax.random.normal(
        k_out, (1 + reservoir_size + input_size, output_size), dtype=jnp.float32)

    return w_in, w_hidden, w_out


def esn_reference_seq(x_seq, hidden, w_in, w_hidden, w_out, alpha,
                      matmul_dtype=None):
    """Pure-JAX reference mirroring the PyTorch forward step by step.

    If matmul_dtype is given, matmul operands (and the streamed input
    projection / per-step hidden operands, mirroring the kernel) are rounded to
    that dtype first; the leaky state update and softmax stay in f32.
    """
    f32 = jnp.float32

    def q(a):
        a = a.astype(f32)
        return a.astype(matmul_dtype).astype(f32) if matmul_dtype is not None else a

    I = x_seq.shape[-1]
    w_in_t = q(w_in.T)
    w_hid_t = q(w_hidden.T)
    w_out_b = w_out[0:1, :].astype(f32)
    w_out_x = q(w_out[1:1 + I, :])
    w_out_h = q(w_out[1 + I:, :])

    def step(h, x_t):
        xq = q(x_t)
        u_t = q(xq @ w_in_t)                       # kernel streams u in bf16
        pre = u_t + q(h) @ w_hid_t                 # == (w_in @ x.T + w_hidden @ h.T).T
        new_h = (1.0 - alpha) * h + alpha * jnp.tanh(pre)
        logits = w_out_b + xq @ w_out_x + q(new_h) @ w_out_h
        return new_h, jax.nn.softmax(logits, axis=-1)

    h_final, y_seq = lax.scan(step, hidden.astype(f32), x_seq.astype(f32))
    return y_seq, h_final


if __name__ == "__main__":
    # Small shapes consistent with the module (x is a sequence of timesteps).
    batch_size = 8
    seq_len = 16
    input_size = 1
    reservoir_size = 128
    output_size = 4
    alpha = 0.5

    key = jax.random.PRNGKey(0)
    k_params, k_x = jax.random.split(key)

    w_in, w_hidden, w_out = init_esn_params(
        k_params, input_size, reservoir_size, output_size,
        sparse_degree=0.5, spectral_radius=0.95)

    x_seq = jax.random.normal(k_x, (seq_len, batch_size, input_size),
                              dtype=jnp.float32)
    hidden0 = jnp.zeros((batch_size, reservoir_size), dtype=jnp.float32)

    y, h_final = esn_forward_seq(x_seq, hidden0, w_in, w_hidden, w_out,
                                 alpha=alpha, weights_dtype=jnp.bfloat16)
    jax.block_until_ready((y, h_final))

    # Correctness: compare against a pure-JAX reference applying the same bf16
    # roundings the kernel uses on the MXU / streamed tensors.
    y_ref, h_ref = esn_reference_seq(x_seq, hidden0, w_in, w_hidden, w_out,
                                     alpha, matmul_dtype=jnp.bfloat16)
    np.testing.assert_allclose(np.asarray(y), np.asarray(y_ref),
                               rtol=2e-3, atol=2e-3)
    np.testing.assert_allclose(np.asarray(h_final), np.asarray(h_ref),
                               rtol=2e-3, atol=2e-3)

    print("KERNEL_OK")
</pallas_src>

<mosaic_0001>
module attributes {stable_mosaic.version = 11 : i64} {
  func.func @esn_output_kernel(%arg0: i32, %arg1: memref<128x128xbf16, #tpu.memory_space<vmem>>, %arg2: memref<128x128xf32, #tpu.memory_space<vmem>>, %arg3: memref<128x128xbf16, #tpu.memory_space<vmem>>, %arg4: memref<128x128xf32, #tpu.memory_space<vmem>>) attributes {dimension_semantics = [#tpu.dimension_semantics<parallel>], iteration_bounds = array<i64: 1>, scalar_prefetch = 0 : i64, scratch_operands = 0 : i64, tpu.core_type = #tpu.core_type<tc>, window_params = [{transform_indices = @transform_0, window_bounds = array<i64: 128, 128>}, {transform_indices = @transform_1, window_bounds = array<i64: 128, 128>}, {pipeline_mode = #tpu.pipeline_mode<synchronous>, transform_indices = @transform_2, window_bounds = array<i64: 128, 128>}, {transform_indices = @transform_3, window_bounds = array<i64: 128, 128>}]} {
    %c0 = arith.constant 0 : index
    %c0_0 = arith.constant 0 : index
    %0 = vector.load %arg2[%c0, %c0_0] : memref<128x128xf32, #tpu.memory_space<vmem>>, vector<128x128xf32>
    %c0_1 = arith.constant 0 : index
    %c0_2 = arith.constant 0 : index
    %1 = vector.load %arg1[%c0_1, %c0_2] : memref<128x128xbf16, #tpu.memory_space<vmem>>, vector<128x128xbf16>
    %c0_3 = arith.constant 0 : index
    %c0_4 = arith.constant 0 : index
    %2 = vector.load %arg3[%c0_3, %c0_4] : memref<128x128xbf16, #tpu.memory_space<vmem>>, vector<128x128xbf16>
    %cst = arith.constant dense<0.000000e+00> : vector<128x128xf32>
    %3 = tpu.matmul %1, %2, %cst {dimension_numbers = #tpu.dot_dimension_numbers<[1], [0], [0], [1], [0, 0, 1, 1], [], []>} : vector<128x128xbf16>, vector<128x128xbf16>, vector<128x128xf32> -> vector<128x128xf32>
    %4 = arith.addf %0, %3 : vector<128x128xf32>
    %cst_5 = arith.constant dense<0xFF800000> : vector<128xf32>
    %5 = vector.multi_reduction <maximumf>, %4, %cst_5 [1] : vector<128x128xf32> to vector<128xf32>
    %6 = vector.shape_cast %5 : vector<128xf32> to vector<128x1xf32>
    %7 = vector.broadcast %6 : vector<128x1xf32> to vector<128x128xf32>
    %8 = arith.subf %4, %7 : vector<128x128xf32>
    %9 = math.exp %8 : vector<128x128xf32>
    %cst_6 = arith.constant dense<0.000000e+00> : vector<128xf32>
    %10 = vector.multi_reduction <add>, %9, %cst_6 [1] : vector<128x128xf32> to vector<128xf32>
    %11 = vector.shape_cast %10 : vector<128xf32> to vector<128x1xf32>
    %12 = tpu.reciprocal %11 {approx = true} : vector<128x1xf32> -> vector<128x1xf32>
    %13 = vector.broadcast %12 : vector<128x1xf32> to vector<128x128xf32>
    %14 = arith.mulf %9, %13 : vector<128x128xf32>
    %c0_7 = arith.constant 0 : index
    %c0_8 = arith.constant 0 : index
    %15 = vector.load %arg4[%c0_7, %c0_8] : memref<128x128xf32, #tpu.memory_space<vmem>>, vector<128x128xf32>
    tpu.vector_store %arg4[%c0_7, %c0_8], %14 {strides = array<i32>} : memref<128x128xf32, #tpu.memory_space<vmem>>, vector<128x128xf32>,
    return
  }
  func.func @transform_0(%arg0: i32) -> (i32, i32) {
    %c0_i32 = arith.constant 0 : i32
    %c0_i32_0 = arith.constant 0 : i32
    return %arg0, %c0_i32 : i32, i32
  }
  func.func @transform_1(%arg0: i32) -> (i32, i32) {
    %c0_i32 = arith.constant 0 : i32
    %c0_i32_0 = arith.constant 0 : i32
    return %arg0, %c0_i32 : i32, i32
  }
  func.func @transform_2(%arg0: i32) -> (i32, i32) {
    %c0_i32 = arith.constant 0 : i32
    %c0_i32_0 = arith.constant 0 : i32
    %c0_i32_1 = arith.constant 0 : i32
    return %c0_i32, %c0_i32_0 : i32, i32
  }
  func.func @transform_3(%arg0: i32) -> (i32, i32) {
    %c0_i32 = arith.constant 0 : i32
    %c0_i32_0 = arith.constant 0 : i32
    return %arg0, %c0_i32 : i32, i32
  }
}

module attributes {stable_mosaic.version = 11 : i64} {
  func.func @esn_recurrent_kernel(%arg0: i32, %arg1: i32, %arg2: memref<8x8x128xbf16, #tpu.memory_space<vmem>>, %arg3: memref<8x128xf32, #tpu.memory_space<vmem>>, %arg4: memref<128x128xbf16, #tpu.memory_space<vmem>>, %arg5: memref<8x8x128xbf16, #tpu.memory_space<vmem>>, %arg6: memref<8x128xf32, #tpu.memory_space<vmem>>) attributes {dimension_semantics = [#tpu.dimension_semantics<parallel>, #tpu.dimension_semantics<arbitrary>], iteration_bounds = array<i64: 1, 2>, scalar_prefetch = 0 : i64, scratch_operands = 0 : i64, tpu.core_type = #tpu.core_type<tc>, window_params = [{transform_indices = @transform_0, window_bounds = array<i64: 8, 8, 128>}, {transform_indices = @transform_1, window_bounds = array<i64: 8, 128>}, {pipeline_mode = #tpu.pipeline_mode<synchronous>, transform_indices = @transform_2, window_bounds = array<i64: 128, 128>}, {transform_indices = @transform_3, window_bounds = array<i64: 8, 8, 128>}, {transform_indices = @transform_4, window_bounds = array<i64: 8, 128>}]} {
    %c0_i32 = arith.constant 0 : i32
    %0 = arith.cmpi eq, %arg1, %c0_i32 : i32
    %1 = arith.extui %0 : i1 to i32
    %c0_i32_0 = arith.constant 0 : i32
    %2 = arith.cmpi ne, %1, %c0_i32_0 : i32
    scf.if %2 {
      %c0_76 = arith.constant 0 : index
      %c0_77 = arith.constant 0 : index
      %157 = vector.load %arg3[%c0_76, %c0_77] : memref<8x128xf32, #tpu.memory_space<vmem>>, vector<8x128xf32>
      %c0_78 = arith.constant 0 : index
      %c0_79 = arith.constant 0 : index
      %158 = vector.load %arg6[%c0_78, %c0_79] : memref<8x128xf32, #tpu.memory_space<vmem>>, vector<8x128xf32>
      tpu.vector_store %arg6[%c0_78, %c0_79], %157 {strides = array<i32>} : memref<8x128xf32, #tpu.memory_space<vmem>>, vector<8x128xf32>,
    } else {
    }
    %c0 = arith.constant 0 : index
    %c0_1 = arith.constant 0 : index
    %3 = vector.load %arg6[%c0, %c0_1] : memref<8x128xf32, #tpu.memory_space<vmem>>, vector<8x128xf32>
    %c0_i32_2 = arith.constant 0 : i32
    %4 = arith.index_cast %c0_i32_2 : i32 to index
    %c0_3 = arith.constant 0 : index
    %c0_4 = arith.constant 0 : index
    %5 = vector.load %arg2[%4, %c0_3, %c0_4] : memref<8x8x128xbf16, #tpu.memory_space<vmem>>, vector<1x8x128xbf16>
    %6 = vector.shape_cast %5 : vector<1x8x128xbf16> to vector<8x128xbf16>
    %7 = arith.extf %6 : vector<8x128xbf16> to vector<8x128xf32>
    %8 = arith.truncf %3 : vector<8x128xf32> to vector<8x128xbf16>
    %c0_5 = arith.constant 0 : index
    %c0_6 = arith.constant 0 : index
    %9 = vector.load %arg4[%c0_5, %c0_6] : memref<128x128xbf16, #tpu.memory_space<vmem>>, vector<128x128xbf16>
    %cst = arith.constant dense<0.000000e+00> : vector<8x128xf32>
    %10 = tpu.matmul %8, %9, %cst {dimension_numbers = #tpu.dot_dimension_numbers<[1], [0], [0], [1], [0, 0, 1, 1], [], []>} : vector<8x128xbf16>, vector<128x128xbf16>, vector<8x128xf32> -> vector<8x128xf32>
    %11 = arith.addf %7, %10 : vector<8x128xf32>
    %cst_7 = arith.constant 5.000000e-01 : f32
    %12 = vector.broadcast %cst_7 : f32 to vector<8x128xf32>
    %13 = arith.mulf %12, %3 : vector<8x128xf32>
    %14 = math.tanh %11 : vector<8x128xf32>
    %cst_8 = arith.constant 5.000000e-01 : f32
    %15 = vector.broadcast %cst_8 : f32 to vector<8x128xf32>
    %16 = arith.mulf %15, %14 : vector<8x128xf32>
    %17 = arith.addf %13, %16 : vector<8x128xf32>
    %18 = arith.truncf %17 : vector<8x128xf32> to vector<8x128xbf16>
    %19 = arith.index_cast %c0_i32_2 : i32 to index
    %c0_9 = arith.constant 0 : index
    %c0_10 = arith.constant 0 : index
    %20 = vector.load %arg5[%19, %c0_9, %c0_10] : memref<8x8x128xbf16, #tpu.memory_space<vmem>>, vector<1x8x128xbf16>
    %21 = vector.shape_cast %20 : vector<1x8x128xbf16> to vector<8x128xbf16>
    %22 = vector.shape_cast %18 : vector<8x128xbf16> to vector<1x8x128xbf16>
    tpu.vector_store %arg5[%19, %c0_9, %c0_10], %22 {strides = array<i32>} : memref<8x8x128xbf16, #tpu.memory_space<vmem>>, vector<1x8x128xbf16>,
    %c1_i32 = arith.constant 1 : i32
    %23 = arith.index_cast %c1_i32 : i32 to index
    %c0_11 = arith.constant 0 : index
    %c0_12 = arith.constant 0 : index
    %24 = vector.load %arg2[%23, %c0_11, %c0_12] : memref<8x8x128xbf16, #tpu.memory_space<vmem>>, vector<1x8x128xbf16>
    %25 = vector.shape_cast %24 : vector<1x8x128xbf16> to vector<8x128xbf16>
    %26 = arith.extf %25 : vector<8x128xbf16> to vector<8x128xf32>
    %27 = arith.truncf %17 : vector<8x128xf32> to vector<8x128xbf16>
    %c0_13 = arith.constant 0 : index
    %c0_14 = arith.constant 0 : index
    %28 = vector.load %arg4[%c0_13, %c0_14] : memref<128x128xbf16, #tpu.memory_space<vmem>>, vector<128x128xbf16>
    %cst_15 = arith.constant dense<0.000000e+00> : vector<8x128xf32>
    %29 = tpu.matmul %27, %28, %cst_15 {dimension_numbers = #tpu.dot_dimension_numbers<[1], [0], [0], [1], [0, 0, 1, 1], [], []>} : vector<8x128xbf16>, vector<128x128xbf16>, vector<8x128xf32> -> vector<8x128xf32>
    %30 = arith.addf %26, %29 : vector<8x128xf32>
    %cst_16 = arith.constant 5.000000e-01 : f32
    %31 = vector.broadcast %cst_16 : f32 to vector<8x128xf32>
    %32 = arith.mulf %31, %17 : vector<8x128xf32>
    %33 = math.tanh %30 : vector<8x128xf32>
    %cst_17 = arith.constant 5.000000e-01 : f32
    %34 = vector.broadcast %cst_17 : f32 to vector<8x128xf32>
    %35 = arith.mulf %34, %33 : vector<8x128xf32>
    %36 = arith.addf %32, %35 : vector<8x128xf32>
    %37 = arith.truncf %36 : vector<8x128xf32> to vector<8x128xbf16>
    %38 = arith.index_cast %c1_i32 : i32 to index
    %c0_18 = arith.constant 0 : index
    %c0_19 = arith.constant 0 : index
    %39 = vector.load %arg5[%38, %c0_18, %c0_19] : memref<8x8x128xbf16, #tpu.memory_space<vmem>>, vector<1x8x128xbf16>
    %40 = vector.shape_cast %39 : vector<1x8x128xbf16> to vector<8x128xbf16>
    %41 = vector.shape_cast %37 : vector<8x128xbf16> to vector<1x8x128xbf16>
    tpu.vector_store %arg5[%38, %c0_18, %c0_19], %41 {strides = array<i32>} : memref<8x8x128xbf16, #tpu.memory_space<vmem>>, vector<1x8x128xbf16>,
    %c2_i32 = arith.constant 2 : i32
    %42 = arith.index_cast %c2_i32 : i32 to index
    %c0_20 = arith.constant 0 : index
    %c0_21 = arith.constant 0 : index
    %43 = vector.load %arg2[%42, %c0_20, %c0_21] : memref<8x8x128xbf16, #tpu.memory_space<vmem>>, vector<1x8x128xbf16>
    %44 = vector.shape_cast %43 : vector<1x8x128xbf16> to vector<8x128xbf16>
    %45 = arith.extf %44 : vector<8x128xbf16> to vector<8x128xf32>
    %46 = arith.truncf %36 : vector<8x128xf32> to vector<8x128xbf16>
    %c0_22 = arith.constant 0 : index
    %c0_23 = arith.constant 0 : index
    %47 = vector.load %arg4[%c0_22, %c0_23] : memref<128x128xbf16, #tpu.memory_space<vmem>>, vector<128x128xbf16>
    %cst_24 = arith.constant dense<0.000000e+00> : vector<8x128xf32>
    %48 = tpu.matmul %46, %47, %cst_24 {dimension_numbers = #tpu.dot_dimension_numbers<[1], [0], [0], [1], [0, 0, 1, 1], [], []>} : vector<8x128xbf16>, vector<128x128xbf16>, vector<8x128xf32> -> vector<8x128xf32>
    %49 = arith.addf %45, %48 : vector<8x128xf32>
    %cst_25 = arith.constant 5.000000e-01 : f32
    %50 = vector.broadcast %cst_25 : f32 to vector<8x128xf32>
    %51 = arith.mulf %50, %36 : vector<8x128xf32>
    %52 = math.tanh %49 : vector<8x128xf32>
    %cst_26 = arith.constant 5.000000e-01 : f32
    %53 = vector.broadcast %cst_26 : f32 to vector<8x128xf32>
    %54 = arith.mulf %53, %52 : vector<8x128xf32>
    %55 = arith.addf %51, %54 : vector<8x128xf32>
    %56 = arith.truncf %55 : vector<8x128xf32> to vector<8x128xbf16>
    %57 = arith.index_cast %c2_i32 : i32 to index
    %c0_27 = arith.constant 0 : index
    %c0_28 = arith.constant 0 : index
    %58 = vector.load %arg5[%57, %c0_27, %c0_28] : memref<8x8x128xbf16, #tpu.memory_space<vmem>>, vector<1x8x128xbf16>
    %59 = vector.shape_cast %58 : vector<1x8x128xbf16> to vector<8x128xbf16>
    %60 = vector.shape_cast %56 : vector<8x128xbf16> to vector<1x8x128xbf16>
    tpu.vector_store %arg5[%57, %c0_27, %c0_28], %60 {strides = array<i32>} : memref<8x8x128xbf16, #tpu.memory_space<vmem>>, vector<1x8x128xbf16>,
    %c3_i32 = arith.constant 3 : i32
    %61 = arith.index_cast %c3_i32 : i32 to index
    %c0_29 = arith.constant 0 : index
    %c0_30 = arith.constant 0 : index
    %62 = vector.load %arg2[%61, %c0_29, %c0_30] : memref<8x8x128xbf16, #tpu.memory_space<vmem>>, vector<1x8x128xbf16>
    %63 = vector.shape_cast %62 : vector<1x8x128xbf16> to vector<8x128xbf16>
    %64 = arith.extf %63 : vector<8x128xbf16> to vector<8x128xf32>
    %65 = arith.truncf %55 : vector<8x128xf32> to vector<8x128xbf16>
    %c0_31 = arith.constant 0 : index
    %c0_32 = arith.constant 0 : index
    %66 = vector.load %arg4[%c0_31, %c0_32] : memref<128x128xbf16, #tpu.memory_space<vmem>>, vector<128x128xbf16>
    %cst_33 = arith.constant dense<0.000000e+00> : vector<8x128xf32>
    %67 = tpu.matmul %65, %66, %cst_33 {dimension_numbers = #tpu.dot_dimension_numbers<[1], [0], [0], [1], [0, 0, 1, 1], [], []>} : vector<8x128xbf16>, vector<128x128xbf16>, vector<8x128xf32> -> vector<8x128xf32>
    %68 = arith.addf %64, %67 : vector<8x128xf32>
    %cst_34 = arith.constant 5.000000e-01 : f32
    %69 = vector.broadcast %cst_34 : f32 to vector<8x128xf32>
    %70 = arith.mulf %69, %55 : vector<8x128xf32>
    %71 = math.tanh %68 : vector<8x128xf32>
    %cst_35 = arith.constant 5.000000e-01 : f32
    %72 = vector.broadcast %cst_35 : f32 to vector<8x128xf32>
    %73 = arith.mulf %72, %71 : vector<8x128xf32>
    %74 = arith.addf %70, %73 : vector<8x128xf32>
    %75 = arith.truncf %74 : vector<8x128xf32> to vector<8x128xbf16>
    %76 = arith.index_cast %c3_i32 : i32 to index
    %c0_36 = arith.constant 0 : index
    %c0_37 = arith.constant 0 : index
    %77 = vector.load %arg5[%76, %c0_36, %c0_37] : memref<8x8x128xbf16, #tpu.memory_space<vmem>>, vector<1x8x128xbf16>
    %78 = vector.shape_cast %77 : vector<1x8x128xbf16> to vector<8x128xbf16>
    %79 = vector.shape_cast %75 : vector<8x128xbf16> to vector<1x8x128xbf16>
    tpu.vector_store %arg5[%76, %c0_36, %c0_37], %79 {strides = array<i32>} : memref<8x8x128xbf16, #tpu.memory_space<vmem>>, vector<1x8x128xbf16>,
    %c4_i32 = arith.constant 4 : i32
    %80 = arith.index_cast %c4_i32 : i32 to index
    %c0_38 = arith.constant 0 : index
    %c0_39 = arith.constant 0 : index
    %81 = vector.load %arg2[%80, %c0_38, %c0_39] : memref<8x8x128xbf16, #tpu.memory_space<vmem>>, vector<1x8x128xbf16>
    %82 = vector.shape_cast %81 : vector<1x8x128xbf16> to vector<8x128xbf16>
    %83 = arith.extf %82 : vector<8x128xbf16> to vector<8x128xf32>
    %84 = arith.truncf %74 : vector<8x128xf32> to vector<8x128xbf16>
    %c0_40 = arith.constant 0 : index
    %c0_41 = arith.constant 0 : index
    %85 = vector.load %arg4[%c0_40, %c0_41] : memref<128x128xbf16, #tpu.memory_space<vmem>>, vector<128x128xbf16>
    %cst_42 = arith.constant dense<0.000000e+00> : vector<8x128xf32>
    %86 = tpu.matmul %84, %85, %cst_42 {dimension_numbers = #tpu.dot_dimension_numbers<[1], [0], [0], [1], [0, 0, 1, 1], [], []>} : vector<8x128xbf16>, vector<128x128xbf16>, vector<8x128xf32> -> vector<8x128xf32>
    %87 = arith.addf %83, %86 : vector<8x128xf32>
    %cst_43 = arith.constant 5.000000e-01 : f32
    %88 = vector.broadcast %cst_43 : f32 to vector<8x128xf32>
    %89 = arith.mulf %88, %74 : vector<8x128xf32>
    %90 = math.tanh %87 : vector<8x128xf32>
    %cst_44 = arith.constant 5.000000e-01 : f32
    %91 = vector.broadcast %cst_44 : f32 to vector<8x128xf32>
    %92 = arith.mulf %91, %90 : vector<8x128xf32>
    %93 = arith.addf %89, %92 : vector<8x128xf32>
    %94 = arith.truncf %93 : vector<8x128xf32> to vector<8x128xbf16>
    %95 = arith.index_cast %c4_i32 : i32 to index
    %c0_45 = arith.constant 0 : index
    %c0_46 = arith.constant 0 : index
    %96 = vector.load %arg5[%95, %c0_45, %c0_46] : memref<8x8x128xbf16, #tpu.memory_space<vmem>>, vector<1x8x128xbf16>
    %97 = vector.shape_cast %96 : vector<1x8x128xbf16> to vector<8x128xbf16>
    %98 = vector.shape_cast %94 : vector<8x128xbf16> to vector<1x8x128xbf16>
    tpu.vector_store %arg5[%95, %c0_45, %c0_46], %98 {strides = array<i32>} : memref<8x8x128xbf16, #tpu.memory_space<vmem>>, vector<1x8x128xbf16>,
    %c5_i32 = arith.constant 5 : i32
    %99 = arith.index_cast %c5_i32 : i32 to index
    %c0_47 = arith.constant 0 : index
    %c0_48 = arith.constant 0 : index
    %100 = vector.load %arg2[%99, %c0_47, %c0_48] : memref<8x8x128xbf16, #tpu.memory_space<vmem>>, vector<1x8x128xbf16>
    %101 = vector.shape_cast %100 : vector<1x8x128xbf16> to vector<8x128xbf16>
    %102 = arith.extf %101 : vector<8x128xbf16> to vector<8x128xf32>
    %103 = arith.truncf %93 : vector<8x128xf32> to vector<8x128xbf16>
    %c0_49 = arith.constant 0 : index
    %c0_50 = arith.constant 0 : index
    %104 = vector.load %arg4[%c0_49, %c0_50] : memref<128x128xbf16, #tpu.memory_space<vmem>>, vector<128x128xbf16>
    %cst_51 = arith.constant dense<0.000000e+00> : vector<8x128xf32>
    %105 = tpu.matmul %103, %104, %cst_51 {dimension_numbers = #tpu.dot_dimension_numbers<[1], [0], [0], [1], [0, 0, 1, 1], [], []>} : vector<8x128xbf16>, vector<128x128xbf16>, vector<8x128xf32> -> vector<8x128xf32>
    %106 = arith.addf %102, %105 : vector<8x128xf32>
    %cst_52 = arith.constant 5.000000e-01 : f32
    %107 = vector.broadcast %cst_52 : f32 to vector<8x128xf32>
    %108 = arith.mulf %107, %93 : vector<8x128xf32>
    %109 = math.tanh %106 : vector<8x128xf32>
    %cst_53 = arith.constant 5.000000e-01 : f32
    %110 = vector.broadcast %cst_53 : f32 to vector<8x128xf32>
    %111 = arith.mulf %110, %109 : vector<8x128xf32>
    %112 = arith.addf %108, %111 : vector<8x128xf32>
    %113 = arith.truncf %112 : vector<8x128xf32> to vector<8x128xbf16>
    %114 = arith.index_cast %c5_i32 : i32 to index
    %c0_54 = arith.constant 0 : index
    %c0_55 = arith.constant 0 : index
    %115 = vector.load %arg5[%114, %c0_54, %c0_55] : memref<8x8x128xbf16, #tpu.memory_space<vmem>>, vector<1x8x128xbf16>
    %116 = vector.shape_cast %115 : vector<1x8x128xbf16> to vector<8x128xbf16>
    %117 = vector.shape_cast %113 : vector<8x128xbf16> to vector<1x8x128xbf16>
    tpu.vector_store %arg5[%114, %c0_54, %c0_55], %117 {strides = array<i32>} : memref<8x8x128xbf16, #tpu.memory_space<vmem>>, vector<1x8x128xbf16>,
    %c6_i32 = arith.constant 6 : i32
    %118 = arith.index_cast %c6_i32 : i32 to index
    %c0_56 = arith.constant 0 : index
    %c0_57 = arith.constant 0 : index
    %119 = vector.load %arg2[%118, %c0_56, %c0_57] : memref<8x8x128xbf16, #tpu.memory_space<vmem>>, vector<1x8x128xbf16>
    %120 = vector.shape_cast %119 : vector<1x8x128xbf16> to vector<8x128xbf16>
    %121 = arith.extf %120 : vector<8x128xbf16> to vector<8x128xf32>
    %122 = arith.truncf %112 : vector<8x128xf32> to vector<8x128xbf16>
    %c0_58 = arith.constant 0 : index
    %c0_59 = arith.constant 0 : index
    %123 = vector.load %arg4[%c0_58, %c0_59] : memref<128x128xbf16, #tpu.memory_space<vmem>>, vector<128x128xbf16>
    %cst_60 = arith.constant dense<0.000000e+00> : vector<8x128xf32>
    %124 = tpu.matmul %122, %123, %cst_60 {dimension_numbers = #tpu.dot_dimension_numbers<[1], [0], [0], [1], [0, 0, 1, 1], [], []>} : vector<8x128xbf16>, vector<128x128xbf16>, vector<8x128xf32> -> vector<8x128xf32>
    %125 = arith.addf %121, %124 : vector<8x128xf32>
    %cst_61 = arith.constant 5.000000e-01 : f32
    %126 = vector.broadcast %cst_61 : f32 to vector<8x128xf32>
    %127 = arith.mulf %126, %112 : vector<8x128xf32>
    %128 = math.tanh %125 : vector<8x128xf32>
    %cst_62 = arith.constant 5.000000e-01 : f32
    %129 = vector.broadcast %cst_62 : f32 to vector<8x128xf32>
    %130 = arith.mulf %129, %128 : vector<8x128xf32>
    %131 = arith.addf %127, %130 : vector<8x128xf32>
    %132 = arith.truncf %131 : vector<8x128xf32> to vector<8x128xbf16>
    %133 = arith.index_cast %c6_i32 : i32 to index
    %c0_63 = arith.constant 0 : index
    %c0_64 = arith.constant 0 : index
    %134 = vector.load %arg5[%133, %c0_63, %c0_64] : memref<8x8x128xbf16, #tpu.memory_space<vmem>>, vector<1x8x128xbf16>
    %135 = vector.shape_cast %134 : vector<1x8x128xbf16> to vector<8x128xbf16>
    %136 = vector.shape_cast %132 : vector<8x128xbf16> to vector<1x8x128xbf16>
    tpu.vector_store %arg5[%133, %c0_63, %c0_64], %136 {strides = array<i32>} : memref<8x8x128xbf16, #tpu.memory_space<vmem>>, vector<1x8x128xbf16>,
    %c7_i32 = arith.constant 7 : i32
    %137 = arith.index_cast %c7_i32 : i32 to index
    %c0_65 = arith.constant 0 : index
    %c0_66 = arith.constant 0 : index
    %138 = vector.load %arg2[%137, %c0_65, %c0_66] : memref<8x8x128xbf16, #tpu.memory_space<vmem>>, vector<1x8x128xbf16>
    %139 = vector.shape_cast %138 : vector<1x8x128xbf16> to vector<8x128xbf16>
    %140 = arith.extf %139 : vector<8x128xbf16> to vector<8x128xf32>
    %141 = arith.truncf %131 : vector<8x128xf32> to vector<8x128xbf16>
    %c0_67 = arith.constant 0 : index
    %c0_68 = arith.constant 0 : index
    %142 = vector.load %arg4[%c0_67, %c0_68] : memref<128x128xbf16, #tpu.memory_space<vmem>>, vector<128x128xbf16>
    %cst_69 = arith.constant dense<0.000000e+00> : vector<8x128xf32>
    %143 = tpu.matmul %141, %142, %cst_69 {dimension_numbers = #tpu.dot_dimension_numbers<[1], [0], [0], [1], [0, 0, 1, 1], [], []>} : vector<8x128xbf16>, vector<128x128xbf16>, vector<8x128xf32> -> vector<8x128xf32>
    %144 = arith.addf %140, %143 : vector<8x128xf32>
    %cst_70 = arith.constant 5.000000e-01 : f32
    %145 = vector.broadcast %cst_70 : f32 to vector<8x128xf32>
    %146 = arith.mulf %145, %131 : vector<8x128xf32>
    %147 = math.tanh %144 : vector<8x128xf32>
    %cst_71 = arith.constant 5.000000e-01 : f32
    %148 = vector.broadcast %cst_71 : f32 to vector<8x128xf32>
    %149 = arith.mulf %148, %147 : vector<8x128xf32>
    %150 = arith.addf %146, %149 : vector<8x128xf32>
    %151 = arith.truncf %150 : vector<8x128xf32> to vector<8x128xbf16>
    %152 = arith.index_cast %c7_i32 : i32 to index
    %c0_72 = arith.constant 0 : index
    %c0_73 = arith.constant 0 : index
    %153 = vector.load %arg5[%152, %c0_72, %c0_73] : memref<8x8x128xbf16, #tpu.memory_space<vmem>>, vector<1x8x128xbf16>
    %154 = vector.shape_cast %153 : vector<1x8x128xbf16> to vector<8x128xbf16>
    %155 = vector.shape_cast %151 : vector<8x128xbf16> to vector<1x8x128xbf16>
    tpu.vector_store %arg5[%152, %c0_72, %c0_73], %155 {strides = array<i32>} : memref<8x8x128xbf16, #tpu.memory_space<vmem>>, vector<1x8x128xbf16>,
    %c8_i32 = arith.constant 8 : i32
    %c0_74 = arith.constant 0 : index
    %c0_75 = arith.constant 0 : index
    %156 = vector.load %arg6[%c0_74, %c0_75] : memref<8x128xf32, #tpu.memory_space<vmem>>, vector<8x128xf32>
    tpu.vector_store %arg6[%c0_74, %c0_75], %150 {strides = array<i32>} : memref<8x128xf32, #tpu.memory_space<vmem>>, vector<8x128xf32>,
    return
  }
  func.func @transform_0(%arg0: i32, %arg1: i32) -> (i32, i32, i32) {
    %c0_i32 = arith.constant 0 : i32
    %c0_i32_0 = arith.constant 0 : i32
    return %arg1, %arg0, %c0_i32 : i32, i32, i32
  }
  func.func @transform_1(%arg0: i32, %arg1: i32) -> (i32, i32) {
    %c0_i32 = arith.constant 0 : i32
    %c0_i32_0 = arith.constant 0 : i32
    return %arg0, %c0_i32 : i32, i32
  }
  func.func @transform_2(%arg0: i32, %arg1: i32) -> (i32, i32) {
    %c0_i32 = arith.constant 0 : i32
    %c0_i32_0 = arith.constant 0 : i32
    %c0_i32_1 = arith.constant 0 : i32
    return %c0_i32, %c0_i32_0 : i32, i32
  }
  func.func @transform_3(%arg0: i32, %arg1: i32) -> (i32, i32, i32) {
    %c0_i32 = arith.constant 0 : i32
    %c0_i32_0 = arith.constant 0 : i32
    return %arg1, %arg0, %c0_i32 : i32, i32, i32
  }
  func.func @transform_4(%arg0: i32, %arg1: i32) -> (i32, i32) {
    %c0_i32 = arith.constant 0 : i32
    %c0_i32_0 = arith.constant 0 : i32
    return %arg0, %c0_i32 : i32, i32
  }
}

</mosaic_0001>

<llo_original>
// kernel: esn_forward_seq.3
$region0: #{esn_forward_seq.3}
  #allocation0 [shape = 'u32[]', space=smem, size = 0x4, offset = 0x4, fixed_abs, tag = 'smem constant byte address 0x4 - core index']
  #allocation1 [shape = 'u32[144,128]{1,0:T(1,128)}', space=vmem, size = 0x12000, scoped, tag = 'internal scratch']
  %s0 = inlined_call_operand.vmem [shape: bf16[128,128], index: 0, kind: input, shape index: {}]
  %s1 = inlined_call_operand.vmem [shape: f32[128,128], index: 1, kind: input, shape index: {}]
  %s2 = inlined_call_operand.vmem [shape: bf16[128,128], index: 2, kind: input, shape index: {}]
  %s3 = inlined_call_operand.vmem [shape: f32[128,128], index: 3, kind: output, shape index: {}]
  %s4 = sld [smem:[#allocation0]]
  $region22: #{esn_forward_seq.3} parent=0
    _
  %s6 = ssub.s32 1, %s4
  %s7 = scalar_select 0, %s6, %s4
  // Predicated region
  $region2: #{esn_forward_seq.3} parent=0 // pred_check
    _
  $region3: #{esn_forward_seq.3} parent=0 // pred_check_branch
    %9 = sbr.rel (0) target = $region5
  $region4: #{esn_forward_seq.3} parent=0 // pred_region
    _
  $region5: #{esn_forward_seq.3} parent=0 // pred_fallthru
    _
  // Predicated region
  $region6: #{esn_forward_seq.3} parent=0 // pred_check
    _
  $region7: #{esn_forward_seq.3} parent=0 // pred_check_branch
    %11 = sbr.rel (0) target = $region9
  $region8: #{esn_forward_seq.3} parent=0 // pred_region
    _
  $region9: #{esn_forward_seq.3} parent=0 // pred_fallthru
    _
  // Predicated region
  $region10: #{esn_forward_seq.3} parent=0 // pred_check
    _
  $region11: #{esn_forward_seq.3} parent=0 // pred_check_branch
    %13 = sbr.rel (0) target = $region13
  $region12: #{esn_forward_seq.3} parent=0 // pred_region
    _
  $region13: #{esn_forward_seq.3} parent=0 // pred_fallthru
    _
  %v15 = vld [vmem:[%s1] sm:$0xff]
  %v16 = vld [vmem:[%s1 + $0x8] sm:$0xff]
  %v17 = vld [vmem:[%s1 + $0x10] sm:$0xff]
  %v18 = vld [vmem:[%s1 + $0x18] sm:$0xff]
  %v19 = vld [vmem:[%s1 + $0x20] sm:$0xff]
  %v20 = vld [vmem:[%s1 + $0x28] sm:$0xff]
  %v21 = vld [vmem:[%s1 + $0x30] sm:$0xff]
  %v22 = vld [vmem:[%s1 + $0x38] sm:$0xff]
  %v23 = vld [vmem:[%s1 + $0x40] sm:$0xff]
  %v24 = vld [vmem:[%s1 + $0x48] sm:$0xff]
  %v25 = vld [vmem:[%s1 + $0x50] sm:$0xff]
  %v26 = vld [vmem:[%s1 + $0x58] sm:$0xff]
  %v27 = vld [vmem:[%s1 + $0x60] sm:$0xff]
  %v28 = vld [vmem:[%s1 + $0x68] sm:$0xff]
  %v29 = vld [vmem:[%s1 + $0x70] sm:$0xff]
  %v30 = vld [vmem:[%s1 + $0x78] sm:$0xff]
  %v31 = vld [vmem:[%s0] sm:$0xf]
  %v32 = vld [vmem:[%s0 + $0x4] sm:$0xf]
  %v33 = vld [vmem:[%s0 + $0x8] sm:$0xf]
  %v34 = vld [vmem:[%s0 + $0xc] sm:$0xf]
  %v35 = vld [vmem:[%s0 + $0x10] sm:$0xf]
  %v36 = vld [vmem:[%s0 + $0x14] sm:$0xf]
  %v37 = vld [vmem:[%s0 + $0x18] sm:$0xf]
  %v38 = vld [vmem:[%s0 + $0x1c] sm:$0xf]
  %v39 = vld [vmem:[%s0 + $0x20] sm:$0xf]
  %v40 = vld [vmem:[%s0 + $0x24] sm:$0xf]
  %v41 = vld [vmem:[%s0 + $0x28] sm:$0xf]
  %v42 = vld [vmem:[%s0 + $0x2c] sm:$0xf]
  %v43 = vld [vmem:[%s0 + $0x30] sm:$0xf]
  %v44 = vld [vmem:[%s0 + $0x34] sm:$0xf]
  %v45 = vld [vmem:[%s0 + $0x38] sm:$0xf]
  %v46 = vld [vmem:[%s0 + $0x3c] sm:$0xf]
  %v47 = vld [vmem:[%s2] sm:$0xf]
  %v48 = vld [vmem:[%s2 + $0x4] sm:$0xf]
  %v49 = vld [vmem:[%s2 + $0x8] sm:$0xf]
  %v50 = vld [vmem:[%s2 + $0xc] sm:$0xf]
  %v51 = vld [vmem:[%s2 + $0x10] sm:$0xf]
  %v52 = vld [vmem:[%s2 + $0x14] sm:$0xf]
  %v53 = vld [vmem:[%s2 + $0x18] sm:$0xf]
  %v54 = vld [vmem:[%s2 + $0x1c] sm:$0xf]
  %v55 = vld [vmem:[%s2 + $0x20] sm:$0xf]
  %v56 = vld [vmem:[%s2 + $0x24] sm:$0xf]
  %v57 = vld [vmem:[%s2 + $0x28] sm:$0xf]
  %v58 = vld [vmem:[%s2 + $0x2c] sm:$0xf]
  %v59 = vld [vmem:[%s2 + $0x30] sm:$0xf]
  %v60 = vld [vmem:[%s2 + $0x34] sm:$0xf]
  %v61 = vld [vmem:[%s2 + $0x38] sm:$0xf]
  %v62 = vld [vmem:[%s2 + $0x3c] sm:$0xf]
  %v79 = vunpack.c.l.b16 %v31
  %v80 = vunpack.c.l.b16 %v32
  %v81 = vunpack.c.l.b16 %v33
  %v82 = vunpack.c.l.b16 %v34
  %v83 = vunpack.c.l.b16 %v35
  %v84 = vunpack.c.l.b16 %v36
  %v85 = vunpack.c.l.b16 %v37
  %v86 = vunpack.c.l.b16 %v38
  %v87 = vunpack.c.l.b16 %v39
  %v88 = vunpack.c.l.b16 %v40
  %v89 = vunpack.c.l.b16 %v41
  %v90 = vunpack.c.l.b16 %v42
  %v91 = vunpack.c.l.b16 %v43
  %v92 = vunpack.c.l.b16 %v44
  %v93 = vunpack.c.l.b16 %v45
  %v94 = vunpack.c.l.b16 %v46
  %v95 = vpack.c.b16 %v80, %v79
  %v96 = vpack.c.b16 %v82, %v81
  %v97 = vpack.c.b16 %v84, %v83
  %v98 = vpack.c.b16 %v86, %v85
  %v99 = vpack.c.b16 %v88, %v87
  %v100 = vpack.c.b16 %v90, %v89
  %v101 = vpack.c.b16 %v92, %v91
  %v102 = vpack.c.b16 %v94, %v93
  %v127 = vunpack.c.l.b16 %v47
  %v128 = vunpack.c.l.b16 %v48
  %v129 = vunpack.c.l.b16 %v49
  %v130 = vunpack.c.l.b16 %v50
  %v131 = vunpack.c.l.b16 %v51
  %v132 = vunpack.c.l.b16 %v52
  %v133 = vunpack.c.l.b16 %v53
  %v134 = vunpack.c.l.b16 %v54
  %v135 = vunpack.c.l.b16 %v55
  %v136 = vunpack.c.l.b16 %v56
  %v137 = vunpack.c.l.b16 %v57
  %v138 = vunpack.c.l.b16 %v58
  %v139 = vunpack.c.l.b16 %v59
  %v140 = vunpack.c.l.b16 %v60
  %v141 = vunpack.c.l.b16 %v61
  %v142 = vunpack.c.l.b16 %v62
  %v143 = vpack.c.b16 %v128, %v127
  %v144 = vpack.c.b16 %v130, %v129
  %v145 = vpack.c.b16 %v132, %v131
  %v146 = vpack.c.b16 %v134, %v133
  %v147 = vpack.c.b16 %v136, %v135
  %v148 = vpack.c.b16 %v138, %v137
  %v149 = vpack.c.b16 %v140, %v139
  %v150 = vpack.c.b16 %v142, %v141
  %159 = vmatprep.subr.bf16.mxu0 0
  %160 = vmatpush1.bf16.msra.mxu0 %v143
  %161 = vmatprep.subr.bf16.mxu0 0
  %162 = vmatpush1.bf16.msra.mxu0 %v144
  %163 = vmatprep.subr.bf16.mxu0 0
  %164 = vmatpush1.bf16.msra.mxu0 %v145
  %165 = vmatprep.subr.bf16.mxu0 0
  %166 = vmatpush1.bf16.msra.mxu0 %v146
  %167 = vmatprep.subr.bf16.mxu0 0
  %168 = vmatpush1.bf16.msra.mxu0 %v147
  %169 = vmatprep.subr.bf16.mxu0 0
  %170 = vmatpush1.bf16.msra.mxu0 %v148
  %171 = vmatprep.subr.bf16.mxu0 0
  %172 = vmatpush1.bf16.msra.mxu0 %v149
  %173 = vmatprep.subr.bf16.mxu0 0
  %174 = vmatpush1.bf16.msra.mxu0 %v150
  %175 = vmatprep.subr.bf16.mxu0 0
  %176 = vmatpush1.bf16.msra.mxu0 0
  %177 = vmatprep.subr.bf16.mxu0 0
  %178 = vmatpush1.bf16.msra.mxu0 0
  %179 = vmatprep.subr.bf16.mxu0 0
  %180 = vmatpush1.bf16.msra.mxu0 0
  %181 = vmatprep.subr.bf16.mxu0 0
  %182 = vmatpush1.bf16.msra.mxu0 0
  %183 = vmatprep.subr.bf16.mxu0 0
  %184 = vmatpush1.bf16.msra.mxu0 0
  %185 = vmatprep.subr.bf16.mxu0 0
  %186 = vmatpush1.bf16.msra.mxu0 0
  %187 = vmatprep.subr.bf16.mxu0 0
  %188 = vmatpush1.bf16.msra.mxu0 0
  %189 = vmatprep.subr.bf16.mxu0 0
  %190 = vmatpush1.bf16.msra.mxu0 0
  %191 = vmatprep.mubr.bf16.mxu0 0
  %192 = vmatmul.mubr.bf16.gmra.mrb[0].mxu0 %v95
  %v193 = vpop.f32.mrb[0].mxu0
  %v194 = vadd.f32 0.0, %v193
  %v195 = vpop.f32.mrb[0].mxu0
  %v196 = vpop.f32.mrb[0].mxu0
  %v197 = vadd.f32 0.0, %v196
  %v198 = vpop.f32.mrb[0].mxu0
  %199 = vmatprep.mubr.bf16.mxu0 0
  %200 = vmatmul.mubr.bf16.gmra.mrb[0].mxu0 %v96
  %v201 = vpop.f32.mrb[0].mxu0
  %v202 = vadd.f32 0.0, %v201
  %v203 = vpop.f32.mrb[0].mxu0
  %v204 = vpop.f32.mrb[0].mxu0
  %v205 = vadd.f32 0.0, %v204
  %v206 = vpop.f32.mrb[0].mxu0
  %207 = vmatprep.mubr.bf16.mxu0 0
  %208 = vmatmul.mubr.bf16.gmra.mrb[0].mxu0 %v97
  %v209 = vpop.f32.mrb[0].mxu0
  %v210 = vadd.f32 0.0, %v209
  %v211 = vpop.f32.mrb[0].mxu0
  %v212 = vpop.f32.mrb[0].mxu0
  %v213 = vadd.f32 0.0, %v212
  %v214 = vpop.f32.mrb[0].mxu0
  %215 = vmatprep.mubr.bf16.mxu0 0
  %216 = vmatmul.mubr.bf16.gmra.mrb[0].mxu0 %v98
  %v217 = vpop.f32.mrb[0].mxu0
  %v218 = vadd.f32 0.0, %v217
  %v219 = vpop.f32.mrb[0].mxu0
  %v220 = vpop.f32.mrb[0].mxu0
  %v221 = vadd.f32 0.0, %v220
  %v222 = vpop.f32.mrb[0].mxu0
  %223 = vmatprep.mubr.bf16.mxu0 0
  %224 = vmatmul.mubr.bf16.gmra.mrb[0].mxu0 %v99
  %v225 = vpop.f32.mrb[0].mxu0
  %v226 = vadd.f32 0.0, %v225
  %v227 = vpop.f32.mrb[0].mxu0
  %v228 = vpop.f32.mrb[0].mxu0
  %v229 = vadd.f32 0.0, %v228
  %v230 = vpop.f32.mrb[0].mxu0
  %231 = vmatprep.mubr.bf16.mxu0 0
  %232 = vmatmul.mubr.bf16.gmra.mrb[0].mxu0 %v100
  %v233 = vpop.f32.mrb[0].mxu0
  %v234 = vadd.f32 0.0, %v233
  %v235 = vpop.f32.mrb[0].mxu0
  %v236 = vpop.f32.mrb[0].mxu0
  %v237 = vadd.f32 0.0, %v236
  %v238 = vpop.f32.mrb[0].mxu0
  %239 = vmatprep.mubr.bf16.mxu0 0
  %240 = vmatmul.mubr.bf16.gmra.mrb[0].mxu0 %v101
  %v241 = vpop.f32.mrb[0].mxu0
  %v242 = vadd.f32 0.0, %v241
  %v243 = vpop.f32.mrb[0].mxu0
  %v244 = vpop.f32.mrb[0].mxu0
  %v245 = vadd.f32 0.0, %v244
  %v246 = vpop.f32.mrb[0].mxu0
  %247 = vmatprep.mubr.bf16.mxu0 0
  %248 = vmatmul.mubr.bf16.gmra.mrb[0].mxu0 %v102
  %v249 = vpop.f32.mrb[0].mxu0
  %v250 = vadd.f32 0.0, %v249
  %v251 = vpop.f32.mrb[0].mxu0
  %v252 = vpop.f32.mrb[0].mxu0
  %v253 = vadd.f32 0.0, %v252
  %v254 = vpop.f32.mrb[0].mxu0
  %255 = vdwg.mxu0
  %v256 = vadd.f32 %v15, %v194
  %v257 = vadd.f32 %v16, %v197
  %v258 = vadd.f32 %v17, %v202
  %v259 = vadd.f32 %v18, %v205
  %v260 = vadd.f32 %v19, %v210
  %v261 = vadd.f32 %v20, %v213
  %v262 = vadd.f32 %v21, %v218
  %v263 = vadd.f32 %v22, %v221
  %v264 = vadd.f32 %v23, %v226
  %v265 = vadd.f32 %v24, %v229
  %v266 = vadd.f32 %v25, %v234
  %v267 = vadd.f32 %v26, %v237
  %v268 = vadd.f32 %v27, %v242
  %v269 = vadd.f32 %v28, %v245
  %v270 = vadd.f32 %v29, %v250
  %v271 = vadd.f32 %v30, %v253
  %272 = vmax.xlane.f32.xlu0 %v256
  %v273 = vpop.xlane.xlu0 %272
  %274 = vmax.xlane.f32.xlu0 %v257
  %v275 = vpop.xlane.xlu0 %274
  %276 = vmax.xlane.f32.xlu0 %v258
  %v277 = vpop.xlane.xlu0 %276
  %278 = vmax.xlane.f32.xlu0 %v259
  %v279 = vpop.xlane.xlu0 %278
  %280 = vmax.xlane.f32.xlu0 %v260
  %v281 = vpop.xlane.xlu0 %280
  %282 = vmax.xlane.f32.xlu0 %v261
  %v283 = vpop.xlane.xlu0 %282
  %284 = vmax.xlane.f32.xlu0 %v262
  %v285 = vpop.xlane.xlu0 %284
  %286 = vmax.xlane.f32.xlu0 %v263
  %v287 = vpop.xlane.xlu0 %286
  %288 = vmax.xlane.f32.xlu0 %v264
  %v289 = vpop.xlane.xlu0 %288
  %290 = vmax.xlane.f32.xlu0 %v265
  %v291 = vpop.xlane.xlu0 %290
  %292 = vmax.xlane.f32.xlu0 %v266
  %v293 = vpop.xlane.xlu0 %292
  %294 = vmax.xlane.f32.xlu0 %v267
  %v295 = vpop.xlane.xlu0 %294
  %296 = vmax.xlane.f32.xlu0 %v268
  %v297 = vpop.xlane.xlu0 %296
  %298 = vmax.xlane.f32.xlu0 %v269
  %v299 = vpop.xlane.xlu0 %298
  %300 = vmax.xlane.f32.xlu0 %v270
  %v301 = vpop.xlane.xlu0 %300
  %302 = vmax.xlane.f32.xlu0 %v271
  %v303 = vpop.xlane.xlu0 %302
  %v304 = vsub.f32 %v256, %v273
  %v305 = vsub.f32 %v257, %v275
  %v306 = vsub.f32 %v258, %v277
  %v307 = vsub.f32 %v259, %v279
  %v308 = vsub.f32 %v260, %v281
  %v309 = vsub.f32 %v261, %v283
  %v310 = vsub.f32 %v262, %v285
  %v311 = vsub.f32 %v263, %v287
  %v312 = vsub.f32 %v264, %v289
  %v313 = vsub.f32 %v265, %v291
  %v314 = vsub.f32 %v266, %v293
  %v315 = vsub.f32 %v267, %v295
  %v316 = vsub.f32 %v268, %v297
  %v317 = vsub.f32 %v269, %v299
  %v318 = vsub.f32 %v270, %v301
  %v319 = vsub.f32 %v271, %v303
  %v320 = vmul.f32 %v304, 1.442695
  %v321 = vpow.pop %v320
  %v322 = vmul.f32 %v305, 1.442695
  %v323 = vpow.pop %v322
  %v324 = vmul.f32 %v306, 1.442695
  %v325 = vpow.pop %v324
  %v326 = vmul.f32 %v307, 1.442695
  %v327 = vpow.pop %v326
  %v328 = vmul.f32 %v308, 1.442695
  %v329 = vpow.pop %v328
  %v330 = vmul.f32 %v309, 1.442695
  %v331 = vpow.pop %v330
  %v332 = vmul.f32 %v310, 1.442695
  %v333 = vpow.pop %v332
  %v334 = vmul.f32 %v311, 1.442695
  %v335 = vpow.pop %v334
  %v336 = vmul.f32 %v312, 1.442695
  %v337 = vpow.pop %v336
  %v338 = vmul.f32 %v313, 1.442695
  %v339 = vpow.pop %v338
  %v340 = vmul.f32 %v314, 1.442695
  %v341 = vpow.pop %v340
  %v342 = vmul.f32 %v315, 1.442695
  %v343 = vpow.pop %v342
  %v344 = vmul.f32 %v316, 1.442695
  %v345 = vpow.pop %v344
  %v346 = vmul.f32 %v317, 1.442695
  %v347 = vpow.pop %v346
  %v348 = vmul.f32 %v318, 1.442695
  %v349 = vpow.pop %v348
  %v350 = vmul.f32 %v319, 1.442695
  %v351 = vpow.pop %v350
  %352 = vadd.xlane.f32.xlu0 %v321
  %v353 = vpop.xlane.xlu0 %352
  %354 = vadd.xlane.f32.xlu0 %v323
  %v355 = vpop.xlane.xlu0 %354
  %356 = vadd.xlane.f32.xlu0 %v325
  %v357 = vpop.xlane.xlu0 %356
  %358 = vadd.xlane.f32.xlu0 %v327
  %v359 = vpop.xlane.xlu0 %358
  %360 = vadd.xlane.f32.xlu0 %v329
  %v361 = vpop.xlane.xlu0 %360
  %362 = vadd.xlane.f32.xlu0 %v331
  %v363 = vpop.xlane.xlu0 %362
  %364 = vadd.xlane.f32.xlu0 %v333
  %v365 = vpop.xlane.xlu0 %364
  %366 = vadd.xlane.f32.xlu0 %v335
  %v367 = vpop.xlane.xlu0 %366
  %368 = vadd.xlane.f32.xlu0 %v337
  %v369 = vpop.xlane.xlu0 %368
  %370 = vadd.xlane.f32.xlu0 %v339
  %v371 = vpop.xlane.xlu0 %370
  %372 = vadd.xlane.f32.xlu0 %v341
  %v373 = vpop.xlane.xlu0 %372
  %374 = vadd.xlane.f32.xlu0 %v343
  %v375 = vpop.xlane.xlu0 %374
  %376 = vadd.xlane.f32.xlu0 %v345
  %v377 = vpop.xlane.xlu0 %376
  %378 = vadd.xlane.f32.xlu0 %v347
  %v379 = vpop.xlane.xlu0 %378
  %380 = vadd.xlane.f32.xlu0 %v349
  %v381 = vpop.xlane.xlu0 %380
  %382 = vadd.xlane.f32.xlu0 %v351
  %v383 = vpop.xlane.xlu0 %382
  %v384 = vrcp.pop %v353
  %v385 = vrcp.pop %v355
  %v386 = vrcp.pop %v357
  %v387 = vrcp.pop %v359
  %v388 = vrcp.pop %v361
  %v389 = vrcp.pop %v363
  %v390 = vrcp.pop %v365
  %v391 = vrcp.pop %v367
  %v392 = vrcp.pop %v369
  %v393 = vrcp.pop %v371
  %v394 = vrcp.pop %v373
  %v395 = vrcp.pop %v375
  %v396 = vrcp.pop %v377
  %v397 = vrcp.pop %v379
  %v398 = vrcp.pop %v381
  %v399 = vrcp.pop %v383
  %v400 = vmul.f32 %v321, %v384
  %v401 = vmul.f32 %v323, %v385
  %v402 = vmul.f32 %v325, %v386
  %v403 = vmul.f32 %v327, %v387
  %v404 = vmul.f32 %v329, %v388
  %v405 = vmul.f32 %v331, %v389
  %v406 = vmul.f32 %v333, %v390
  %v407 = vmul.f32 %v335, %v391
  %v408 = vmul.f32 %v337, %v392
  %v409 = vmul.f32 %v339, %v393
  %v410 = vmul.f32 %v341, %v394
  %v411 = vmul.f32 %v343, %v395
  %v412 = vmul.f32 %v345, %v396
  %v413 = vmul.f32 %v347, %v397
  %v414 = vmul.f32 %v349, %v398
  %v415 = vmul.f32 %v351, %v399
  %416 = vst [vmem:[%s3] sm:$0xff] %v400
  %417 = vst [vmem:[%s3 + $0x8] sm:$0xff] %v401
  %418 = vst [vmem:[%s3 + $0x10] sm:$0xff] %v402
  %419 = vst [vmem:[%s3 + $0x18] sm:$0xff] %v403
  %420 = vst [vmem:[%s3 + $0x20] sm:$0xff] %v404
  %421 = vst [vmem:[%s3 + $0x28] sm:$0xff] %v405
  %422 = vst [vmem:[%s3 + $0x30] sm:$0xff] %v406
  %423 = vst [vmem:[%s3 + $0x38] sm:$0xff] %v407
  %424 = vst [vmem:[%s3 + $0x40] sm:$0xff] %v408
  %425 = vst [vmem:[%s3 + $0x48] sm:$0xff] %v409
  %426 = vst [vmem:[%s3 + $0x50] sm:$0xff] %v410
  %427 = vst [vmem:[%s3 + $0x58] sm:$0xff] %v411
  %428 = vst [vmem:[%s3 + $0x60] sm:$0xff] %v412
  %429 = vst [vmem:[%s3 + $0x68] sm:$0xff] %v413
  %430 = vst [vmem:[%s3 + $0x70] sm:$0xff] %v414
  %431 = vst [vmem:[%s3 + $0x78] sm:$0xff] %v415
  // Predicated region
  $region14: #{esn_forward_seq.3} parent=0 // pred_check
    _
  $region15: #{esn_forward_seq.3} parent=0 // pred_check_branch
    %433 = sbr.rel (0) target = $region17
  $region16: #{esn_forward_seq.3} parent=0 // pred_region
    _
  $region17: #{esn_forward_seq.3} parent=0 // pred_fallthru
    _
  // Predicated region
  $region18: #{esn_forward_seq.3} parent=0 // pred_check
    _
  $region19: #{esn_forward_seq.3} parent=0 // pred_check_branch
    %435 = sbr.rel (0) target = $region21
  $region20: #{esn_forward_seq.3} parent=0 // pred_region
    _
  $region21: #{esn_forward_seq.3} parent=0 // pred_fallthru
    _

// kernel: esn_forward_seq.2
$region0: #{esn_forward_seq.2}
  #allocation0 [shape = 'u32[]', space=smem, size = 0x4, offset = 0x4, fixed_abs, tag = 'smem constant byte address 0x4 - core index']
  #allocation1 [shape = 'u32[144,128]{1,0:T(1,128)}', space=vmem, size = 0x12000, scoped, tag = 'internal scratch']
  %s0 = inlined_call_operand.vmem [shape: bf16[16,8,128], index: 0, kind: input, shape index: {}]
  %s1 = inlined_call_operand.vmem [shape: f32[8,128], index: 1, kind: input, shape index: {}]
  %s2 = inlined_call_operand.vmem [shape: bf16[128,128], index: 2, kind: input, shape index: {}]
  %s3 = inlined_call_operand.vmem [shape: bf16[16,8,128], index: 3, kind: output, shape index: {0}]
  %s4 = inlined_call_operand.hbm [shape: f32[8,128], index: 4, kind: output, shape index: {1}]
  %5 = xla_tuple %s3, %s4
  %s6 = sld [smem:[#allocation0]]
  $region57: #{esn_forward_seq.2} parent=0
    _
  %s8 = ssub.s32 1, %s6
  %s9 = scalar_select 0, %s8, %s6
  $region1: #{esn_forward_seq.2} parent=0
    #allocation2 [shape = 'u8[4096]{0}', space=vmem, size = 0x1000, scoped, tag = 'output window, operand 1, single buffered']
    #allocation3 [shape = 's32[2]{0}', space=sflag, size = 0x8, scoped, tag = 'scoped memory for esn_forward_seq.2']
    %10 = vsyncpa [#allocation3], 0
    loop: start=0, step=1, limit=4
    $region2: #{esn_forward_seq.2} parent=1 // loop_pre_header
      _
    $region3: #{esn_forward_seq.2} parent=1 // loop_header
      %s12 = sphi 0, %s16
      %p13 = scmp.ge.s32.totalorder %s12, 4
      %s19 = sphi 0, %s31
      %s20 = sphi 0, %s27
      %s21 = sphi 0, %s19
      %s22 = sphi 0, %s20
      %s23 = sphi 0, %s21
      %s24 = sphi 0, %s22
      %s36 = sphi 0, %s38
      %s39 = sphi 0, %s36
      %s40 = sphi 0, %s39
      %s56 = sphi 0, %s40
      %s62 = sphi 0, %s64
      %s65 = sphi 0, %s62
      %s66 = sphi 0, %s65
      %s82 = sphi 0, %s66
      %s86 = sphi 0, %s86
      %s88 = sphi 0, %s86
      %s89 = sphi 0, %s88
      %s103 = sphi 0, %s89
      %s111 = sphi 0, %s113
      %s114 = sphi 0, %s111
      %s115 = sphi 0, %s114
      %s131 = sphi 0, %s115
      %s137 = sphi 0, %s139
      %s140 = sphi 0, %s137
      %s141 = sphi 0, %s140
      %s157 = sphi 0, %s141
    $region4: #{esn_forward_seq.2} parent=1 // loop_header_branch
      %15 = sbr.rel (%p13) target = $region8
    $region5: #{esn_forward_seq.2} parent=1 // loop_body
      %s17 = ssub.s32 %s12, 1
      %s18 = ssub.s32 %s12, 2
      %s25 = sadd.s32 1, %s20
      %p26 = scmp.ge.s32.totalorder %s25, 2
      %s27 = scalar_select %p26, 0, %s25
      %s28 = sadd.s32 1, %s19
      %s29 = scalar_select %p26, %s28, %s19
      %p30 = scmp.ge.s32.totalorder %s29, 1
      %s31 = scalar_select %p30, 0, %s29
      %s32 = ssub.s32 %s20, %s27
      %s33 = ssub.s32 %s19, %s31
      %s34 = sor.u32 %s32, %s33
      %p35 = scmp.eq.s32.totalorder %s34, 0
      %s37 = sadd.s32 %s36, 1
      %s38 = scalar_select %p35, %s36, %s37
      %p41 = pneg %p35
      %p42 = scmp.eq.s32.totalorder %s12, 1
      %p43 = por %p41, %p42
      %p44 = scmp.ne.s32.totalorder %s36, %s39
      %p45 = scmp.eq.s32.totalorder %s12, 0
      %p46 = por %p44, %p45
      %p47 = scmp.ne.s32.totalorder %s36, %s39
      %p48 = scmp.eq.s32.totalorder %s17, 1
      %p49 = por %p47, %p48
      %p50 = scmp.ne.s32.totalorder %s39, %s40
      %p51 = scmp.eq.s32.totalorder %s17, 0
      %p52 = por %p50, %p51
      %p53 = scmp.ne.s32.totalorder %s39, %s40
      %p54 = scmp.eq.s32.totalorder %s18, 1
      %p55 = por %p53, %p54
      %p57 = scmp.ne.s32.totalorder %s40, %s56
      %p58 = scmp.eq.s32.totalorder %s18, 0
      %p59 = por %p57, %p58
      %s60 = ssub.s32 %s19, %s31
      %p61 = scmp.eq.s32.totalorder %s60, 0
      %s63 = sadd.s32 %s62, 1
      %s64 = scalar_select %p61, %s62, %s63
      %p67 = pneg %p61
      %p68 = scmp.eq.s32.totalorder %s12, 1
      %p69 = por %p67, %p68
      %p70 = scmp.ne.s32.totalorder %s62, %s65
      %p71 = scmp.eq.s32.totalorder %s12, 0
      %p72 = por %p70, %p71
      %p73 = scmp.ne.s32.totalorder %s62, %s65
      %p74 = scmp.eq.s32.totalorder %s17, 1
      %p75 = por %p73, %p74
      %p76 = scmp.ne.s32.totalorder %s65, %s66
      %p77 = scmp.eq.s32.totalorder %s17, 0
      %p78 = por %p76, %p77
      %p79 = scmp.ne.s32.totalorder %s65, %s66
      %p80 = scmp.eq.s32.totalorder %s18, 1
      %p81 = por %p79, %p80
      %p83 = scmp.ne.s32.totalorder %s66, %s82
      %p84 = scmp.eq.s32.totalorder %s18, 0
      %p85 = por %p83, %p84
      %s87 = sadd.s32 %s86, 1
      %p90 = scmp.eq.s32.totalorder %s12, 1
      %p91 = scmp.ne.s32.totalorder %s86, %s88
      %p92 = scmp.eq.s32.totalorder %s12, 0
      %p93 = por %p91, %p92
      %p94 = scmp.ne.s32.totalorder %s86, %s88
      %p95 = scmp.eq.s32.totalorder %s17, 1
      %p96 = por %p94, %p95
      %p97 = scmp.ne.s32.totalorder %s88, %s89
      %p98 = scmp.eq.s32.totalorder %s17, 0
      %p99 = por %p97, %p98
      %p100 = scmp.ne.s32.totalorder %s88, %s89
      %p101 = scmp.eq.s32.totalorder %s18, 1
      %p102 = por %p100, %p101
      %p104 = scmp.ne.s32.totalorder %s89, %s103
      %p105 = scmp.eq.s32.totalorder %s18, 0
      %p106 = por %p104, %p105
      %s107 = ssub.s32 %s20, %s27
      %s108 = ssub.s32 %s19, %s31
      %s109 = sor.u32 %s107, %s108
      %p110 = scmp.eq.s32.totalorder %s109, 0
      %s112 = sadd.s32 %s111, 1
      %s113 = scalar_select %p110, %s111, %s112
      %p116 = pneg %p110
      %p117 = scmp.eq.s32.totalorder %s12, 1
      %p118 = por %p116, %p117
      %p119 = scmp.ne.s32.totalorder %s111, %s114
      %p120 = scmp.eq.s32.totalorder %s12, 0
      %p121 = por %p119, %p120
      %p122 = scmp.ne.s32.totalorder %s111, %s114
      %p123 = scmp.eq.s32.totalorder %s17, 1
      %p124 = por %p122, %p123
      %p125 = scmp.ne.s32.totalorder %s114, %s115
      %p126 = scmp.eq.s32.totalorder %s17, 0
      %p127 = por %p125, %p126
      %p128 = scmp.ne.s32.totalorder %s114, %s115
      %p129 = scmp.eq.s32.totalorder %s18, 1
      %p130 = por %p128, %p129
      %p132 = scmp.ne.s32.totalorder %s115, %s131
      %p133 = scmp.eq.s32.totalorder %s18, 0
      %p134 = por %p132, %p133
      %s135 = ssub.s32 %s19, %s31
      %p136 = scmp.eq.s32.totalorder %s135, 0
      %s138 = sadd.s32 %s137, 1
      %s139 = scalar_select %p136, %s137, %s138
      %p142 = pneg %p136
      %p143 = scmp.eq.s32.totalorder %s12, 1
      %p144 = por %p142, %p143
      %p145 = scmp.ne.s32.totalorder %s137, %s140
      %p146 = scmp.eq.s32.totalorder %s12, 0
      %p147 = por %p145, %p146
      %p148 = scmp.ne.s32.totalorder %s137, %s140
      %p149 = scmp.eq.s32.totalorder %s17, 1
      %p150 = por %p148, %p149
      %p151 = scmp.ne.s32.totalorder %s140, %s141
      %p152 = scmp.eq.s32.totalorder %s17, 0
      %p153 = por %p151, %p152
      %p154 = scmp.ne.s32.totalorder %s140, %s141
      %p155 = scmp.eq.s32.totalorder %s18, 1
      %p156 = por %p154, %p155
      %p158 = scmp.ne.s32.totalorder %s141, %s157
      %p159 = scmp.eq.s32.totalorder %s18, 0
      %p160 = por %p158, %p159
      %p161 = scmp.le.s32.totalorder 1, %s12
      %p162 = scmp.lt.s32.totalorder %s12, 3
      %p163 = pnand %p161, %p162
      %p164 = pneg %p163
      // Predicated region
      $region9: #{esn_forward_seq.2} parent=5 // pred_check
        _
      $region10: #{esn_forward_seq.2} parent=5 // pred_check_branch
        %166 = sbr.rel (%p163) target = $region12
      $region11: #{esn_forward_seq.2} parent=5 // pred_region
        %s167 = ssub.s32 %s12, 1
        // Predicated region
        $region13: #{esn_forward_seq.2} parent=11 // pred_check
          %p168 = pneg %p78
        $region14: #{esn_forward_seq.2} parent=11 // pred_check_branch
          %170 = sbr.rel (%p168) target = $region16
        $region15: #{esn_forward_seq.2} parent=11 // pred_region
          %p171 = scmp.lt.s32.totalorder %s21, 0
          %s172 = scalar_select %p171, %s21, 0
          %s173 = smul.addr %s172, 8
          %s174 = scalar_lea.vmem %s1, %s173
        $region16: #{esn_forward_seq.2} parent=11 // pred_fallthru
          _
        // Predicated region
        $region17: #{esn_forward_seq.2} parent=11 // pred_check
          %p175 = pneg %p99
        $region18: #{esn_forward_seq.2} parent=11 // pred_check_branch
          %177 = sbr.rel (%p175) target = $region20
        $region19: #{esn_forward_seq.2} parent=11 // pred_region
          _
        $region20: #{esn_forward_seq.2} parent=11 // pred_fallthru
          _
      $region12: #{esn_forward_seq.2} parent=5 // pred_fallthru
        _
      %p178 = scmp.lt.s32.totalorder %s12, 2
      // Predicated region
      $region21: #{esn_forward_seq.2} parent=5 // pred_check
        %p179 = pneg %p178
      $region22: #{esn_forward_seq.2} parent=5 // pred_check_branch
        %181 = sbr.rel (%p179) target = $region24
      $region23: #{esn_forward_seq.2} parent=5 // pred_region
        // Predicated region
        $region25: #{esn_forward_seq.2} parent=23 // pred_check
          %p182 = pneg %p46
        $region26: #{esn_forward_seq.2} parent=23 // pred_check_branch
          %184 = sbr.rel (%p182) target = $region28
        $region27: #{esn_forward_seq.2} parent=23 // pred_region
          %s185 = smul.u32 8, %s20
          %p186 = scmp.lt.s32.totalorder %s185, 15
          %s187 = scalar_select %p186, %s185, 15
          %p188 = scmp.lt.s32.totalorder %s19, 0
          %s189 = scalar_select %p188, %s19, 0
          %s190 = sadd.s32 %s189, %s187
          %s191 = smul.addr %s190, 4
          %s192 = scalar_lea.vmem %s0, %s191
          %s193 = smul.u32 8, %s20
        $region28: #{esn_forward_seq.2} parent=23 // pred_fallthru
          _
      $region24: #{esn_forward_seq.2} parent=5 // pred_fallthru
        _
      %p194 = scmp.le.s32.totalorder 1, %s12
      %p195 = scmp.lt.s32.totalorder %s12, 3
      %p196 = pnand %p194, %p195
      %p197 = pneg %p196
      // Predicated region
      $region29: #{esn_forward_seq.2} parent=5 // pred_check
        _
      $region30: #{esn_forward_seq.2} parent=5 // pred_check_branch
        %199 = sbr.rel (%p196) target = $region32
      $region31: #{esn_forward_seq.2} parent=5 // pred_region
        %s200 = ssub.s32 %s12, 1
        %s201 = smul.u32 8, %s22
        %p202 = scmp.lt.s32.totalorder %s201, 15
        %s203 = scalar_select %p202, %s201, 15
        %p204 = scmp.lt.s32.totalorder %s21, 0
        %s205 = scalar_select %p204, %s21, 0
        %s206 = sadd.s32 %s205, %s203
        %s207 = smul.addr %s206, 4
        %s208 = scalar_lea.vmem %s0, %s207
        %p209 = pneg %p52
        %p210 = pneg %p49
        %p211 = scmp.lt.s32.totalorder %s21, 0
        %s212 = scalar_select %p211, %s21, 0
        %s213 = smul.addr %s212, 8
        %s214 = scalar_lea.vmem %s1, %s213
        %p215 = pneg %p78
        %p216 = pneg %p75
        %p217 = pneg %p99
        %p218 = pneg %p96
        %p219 = pneg %p127
        %p220 = pneg %p124
        %s221 = smul.u32 8, %s22
        %p222 = scmp.lt.s32.totalorder %s221, 15
        %s223 = scalar_select %p222, %s221, 15
        %p224 = scmp.lt.s32.totalorder %s21, 0
        %s225 = scalar_select %p224, %s21, 0
        %s226 = sadd.s32 %s225, %s223
        %s227 = smul.addr %s226, 4
        %s228 = scalar_lea.vmem %s3, %s227
        %p229 = pneg %p153
        %p230 = pneg %p150
        %s231 = smul.u32 8, %s22
        %p232 = scmp.lt.s32.totalorder %s231, 15
        %s233 = scalar_select %p232, %s231, 15
        %p234 = scmp.lt.s32.totalorder %s21, 0
        %s235 = scalar_select %p234, %s21, 0
        %s236 = sadd.s32 %s235, %s233
        %s237 = smul.addr %s236, 4
        %s238 = scalar_lea.vmem %s0, %s237
        %s239 = smul.u32 8, %s22
        %p240 = scmp.lt.s32.totalorder %s21, 0
        %s241 = scalar_select %p240, %s21, 0
        %s242 = smul.addr %s241, 8
        %s243 = scalar_lea.vmem %s1, %s242
        %s244 = smul.u32 8, %s22
        %p245 = scmp.lt.s32.totalorder %s244, 15
        %s246 = scalar_select %p245, %s244, 15
        %p247 = scmp.lt.s32.totalorder %s21, 0
        %s248 = scalar_select %p247, %s21, 0
        %s249 = sadd.s32 %s248, %s246
        %s250 = smul.addr %s249, 4
        %s251 = scalar_lea.vmem %s3, %s250
        %s252 = smul.u32 8, %s22
        %p254 = scmp.eq.s32.totalorder %s22, 0
        // Predicated region
        $region33: #{esn_forward_seq.2} parent=31 // pred_check
          %p255 = pneg %p254
        $region34: #{esn_forward_seq.2} parent=31 // pred_check_branch
          %257 = sbr.rel (%p255) target = $region36
        $region35: #{esn_forward_seq.2} parent=31 // pred_region
          %v258 = vld [vmem:[%s243] sm:$0xff]
          %259 = vst [vmem:[#allocation2] sm:$0xff] %v258
        $region36: #{esn_forward_seq.2} parent=31 // pred_fallthru
          _
        %v260 = vld [vmem:[#allocation2] sm:$0xff]
        %v261 = vld [vmem:[%s238] sm:$0xf]
        %v262 = vunpack.c.l.bf16 %v261
        %v263 = vpack.c.bf16 %v260, %v260
        %v264 = vld [vmem:[%s2] sm:$0xf]
        %v265 = vld [vmem:[%s2 + $0x4] sm:$0xf]
        %v266 = vld [vmem:[%s2 + $0x8] sm:$0xf]
        %v267 = vld [vmem:[%s2 + $0xc] sm:$0xf]
        %v268 = vld [vmem:[%s2 + $0x10] sm:$0xf]
        %v269 = vld [vmem:[%s2 + $0x14] sm:$0xf]
        %v270 = vld [vmem:[%s2 + $0x18] sm:$0xf]
        %v271 = vld [vmem:[%s2 + $0x1c] sm:$0xf]
        %v272 = vld [vmem:[%s2 + $0x20] sm:$0xf]
        %v273 = vld [vmem:[%s2 + $0x24] sm:$0xf]
        %v274 = vld [vmem:[%s2 + $0x28] sm:$0xf]
        %v275 = vld [vmem:[%s2 + $0x2c] sm:$0xf]
        %v276 = vld [vmem:[%s2 + $0x30] sm:$0xf]
        %v277 = vld [vmem:[%s2 + $0x34] sm:$0xf]
        %v278 = vld [vmem:[%s2 + $0x38] sm:$0xf]
        %v279 = vld [vmem:[%s2 + $0x3c] sm:$0xf]
        %v296 = vunpack.c.l.b16 %v264
        %v297 = vunpack.c.l.b16 %v265
        %v298 = vunpack.c.l.b16 %v266
        %v299 = vunpack.c.l.b16 %v267
        %v300 = vunpack.c.l.b16 %v268
        %v301 = vunpack.c.l.b16 %v269
        %v302 = vunpack.c.l.b16 %v270
        %v303 = vunpack.c.l.b16 %v271
        %v304 = vunpack.c.l.b16 %v272
        %v305 = vunpack.c.l.b16 %v273
        %v306 = vunpack.c.l.b16 %v274
        %v307 = vunpack.c.l.b16 %v275
        %v308 = vunpack.c.l.b16 %v276
        %v309 = vunpack.c.l.b16 %v277
        %v310 = vunpack.c.l.b16 %v278
        %v311 = vunpack.c.l.b16 %v279
        %v312 = vpack.c.b16 %v297, %v296
        %v313 = vpack.c.b16 %v299, %v298
        %v314 = vpack.c.b16 %v301, %v300
        %v315 = vpack.c.b16 %v303, %v302
        %v316 = vpack.c.b16 %v305, %v304
        %v317 = vpack.c.b16 %v307, %v306
        %v318 = vpack.c.b16 %v309, %v308
        %v319 = vpack.c.b16 %v311, %v310
        %328 = vmatprep.subr.bf16.mxu0 0
        %329 = vmatpush1.bf16.msra.mxu0 %v312
        %330 = vmatprep.subr.bf16.mxu0 0
        %331 = vmatpush1.bf16.msra.mxu0 %v313
        %332 = vmatprep.subr.bf16.mxu0 0
        %333 = vmatpush1.bf16.msra.mxu0 %v314
        %334 = vmatprep.subr.bf16.mxu0 0
        %335 = vmatpush1.bf16.msra.mxu0 %v315
        %336 = vmatprep.subr.bf16.mxu0 0
        %337 = vmatpush1.bf16.msra.mxu0 %v316
        %338 = vmatprep.subr.bf16.mxu0 0
        %339 = vmatpush1.bf16.msra.mxu0 %v317
        %340 = vmatprep.subr.bf16.mxu0 0
        %341 = vmatpush1.bf16.msra.mxu0 %v318
        %342 = vmatprep.subr.bf16.mxu0 0
        %343 = vmatpush1.bf16.msra.mxu0 %v319
        %344 = vmatprep.subr.bf16.mxu0 0
        %345 = vmatpush1.bf16.msra.mxu0 0
        %346 = vmatprep.subr.bf16.mxu0 0
        %347 = vmatpush1.bf16.msra.mxu0 0
        %348 = vmatprep.subr.bf16.mxu0 0
        %349 = vmatpush1.bf16.msra.mxu0 0
        %350 = vmatprep.subr.bf16.mxu0 0
        %351 = vmatpush1.bf16.msra.mxu0 0
        %352 = vmatprep.subr.bf16.mxu0 0
        %353 = vmatpush1.bf16.msra.mxu0 0
        %354 = vmatprep.subr.bf16.mxu0 0
        %355 = vmatpush1.bf16.msra.mxu0 0
        %356 = vmatprep.subr.bf16.mxu0 0
        %357 = vmatpush1.bf16.msra.mxu0 0
        %358 = vmatprep.subr.bf16.mxu0 0
        %359 = vmatpush1.bf16.msra.mxu0 0
        %360 = vmatprep.mubr.bf16.mxu0 0
        %361 = vmatmul.mubr.bf16.gmra.mrb[0].mxu0 %v263
        %v362 = vpop.f32.mrb[0].mxu0
        %v363 = vadd.f32 0.0, %v362
        %v364 = vpop.f32.mrb[0].mxu0
        %v365 = vpop.f32.mrb[0].mxu0
        %v366 = vpop.f32.mrb[0].mxu0
        %367 = vdwg.mxu0
        %v368 = vadd.f32 %v262, %v363
        %v369 = vmul.f32 %v260, 0.5
        %v370 = vtanh.pop %v368
        %v371 = vmul.f32 %v370, 0.5
        %v372 = vadd.f32 %v369, %v371
        %v373 = vpack.c.bf16 %v372, %v372
        %374 = vst [vmem:[%s251] sm:$0xf] %v373
        %s375 = scalar_lea.vmem %s238, 4
        %v376 = vld [vmem:[%s375] sm:$0xf]
        %v377 = vunpack.c.l.bf16 %v376
        %v378 = vld [vmem:[%s2] sm:$0xf]
        %v379 = vld [vmem:[%s2 + $0x4] sm:$0xf]
        %v380 = vld [vmem:[%s2 + $0x8] sm:$0xf]
        %v381 = vld [vmem:[%s2 + $0xc] sm:$0xf]
        %v382 = vld [vmem:[%s2 + $0x10] sm:$0xf]
        %v383 = vld [vmem:[%s2 + $0x14] sm:$0xf]
        %v384 = vld [vmem:[%s2 + $0x18] sm:$0xf]
        %v385 = vld [vmem:[%s2 + $0x1c] sm:$0xf]
        %v386 = vld [vmem:[%s2 + $0x20] sm:$0xf]
        %v387 = vld [vmem:[%s2 + $0x24] sm:$0xf]
        %v388 = vld [vmem:[%s2 + $0x28] sm:$0xf]
        %v389 = vld [vmem:[%s2 + $0x2c] sm:$0xf]
        %v390 = vld [vmem:[%s2 + $0x30] sm:$0xf]
        %v391 = vld [vmem:[%s2 + $0x34] sm:$0xf]
        %v392 = vld [vmem:[%s2 + $0x38] sm:$0xf]
        %v393 = vld [vmem:[%s2 + $0x3c] sm:$0xf]
        %v410 = vunpack.c.l.b16 %v378
        %v411 = vunpack.c.l.b16 %v379
        %v412 = vunpack.c.l.b16 %v380
        %v413 = vunpack.c.l.b16 %v381
        %v414 = vunpack.c.l.b16 %v382
        %v415 = vunpack.c.l.b16 %v383
        %v416 = vunpack.c.l.b16 %v384
        %v417 = vunpack.c.l.b16 %v385
        %v418 = vunpack.c.l.b16 %v386
        %v419 = vunpack.c.l.b16 %v387
        %v420 = vunpack.c.l.b16 %v388
        %v421 = vunpack.c.l.b16 %v389
        %v422 = vunpack.c.l.b16 %v390
        %v423 = vunpack.c.l.b16 %v391
        %v424 = vunpack.c.l.b16 %v392
        %v425 = vunpack.c.l.b16 %v393
        %v426 = vpack.c.b16 %v411, %v410
        %v427 = vpack.c.b16 %v413, %v412
        %v428 = vpack.c.b16 %v415, %v414
        %v429 = vpack.c.b16 %v417, %v416
        %v430 = vpack.c.b16 %v419, %v418
        %v431 = vpack.c.b16 %v421, %v420
        %v432 = vpack.c.b16 %v423, %v422
        %v433 = vpack.c.b16 %v425, %v424
        %442 = vmatprep.subr.bf16.mxu0 0
        %443 = vmatpush1.bf16.msra.mxu0 %v426
        %444 = vmatprep.subr.bf16.mxu0 0
        %445 = vmatpush1.bf16.msra.mxu0 %v427
        %446 = vmatprep.subr.bf16.mxu0 0
        %447 = vmatpush1.bf16.msra.mxu0 %v428
        %448 = vmatprep.subr.bf16.mxu0 0
        %449 = vmatpush1.bf16.msra.mxu0 %v429
        %450 = vmatprep.subr.bf16.mxu0 0
        %451 = vmatpush1.bf16.msra.mxu0 %v430
        %452 = vmatprep.subr.bf16.mxu0 0
        %453 = vmatpush1.bf16.msra.mxu0 %v431
        %454 = vmatprep.subr.bf16.mxu0 0
        %455 = vmatpush1.bf16.msra.mxu0 %v432
        %456 = vmatprep.subr.bf16.mxu0 0
        %457 = vmatpush1.bf16.msra.mxu0 %v433
        %458 = vmatprep.subr.bf16.mxu0 0
        %459 = vmatpush1.bf16.msra.mxu0 0
        %460 = vmatprep.subr.bf16.mxu0 0
        %461 = vmatpush1.bf16.msra.mxu0 0
        %462 = vmatprep.subr.bf16.mxu0 0
        %463 = vmatpush1.bf16.msra.mxu0 0
        %464 = vmatprep.subr.bf16.mxu0 0
        %465 = vmatpush1.bf16.msra.mxu0 0
        %466 = vmatprep.subr.bf16.mxu0 0
        %467 = vmatpush1.bf16.msra.mxu0 0
        %468 = vmatprep.subr.bf16.mxu0 0
        %469 = vmatpush1.bf16.msra.mxu0 0
        %470 = vmatprep.subr.bf16.mxu0 0
        %471 = vmatpush1.bf16.msra.mxu0 0
        %472 = vmatprep.subr.bf16.mxu0 0
        %473 = vmatpush1.bf16.msra.mxu0 0
        %474 = vmatprep.mubr.bf16.mxu0 0
        %475 = vmatmul.mubr.bf16.gmra.mrb[0].mxu0 %v373
        %v476 = vpop.f32.mrb[0].mxu0
        %v477 = vadd.f32 0.0, %v476
        %v478 = vpop.f32.mrb[0].mxu0
        %v479 = vpop.f32.mrb[0].mxu0
        %v480 = vpop.f32.mrb[0].mxu0
        %481 = vdwg.mxu0
        %v482 = vadd.f32 %v377, %v477
        %v483 = vmul.f32 %v372, 0.5
        %v484 = vtanh.pop %v482
        %v485 = vmul.f32 %v484, 0.5
        %v486 = vadd.f32 %v483, %v485
        %v487 = vpack.c.bf16 %v486, %v486
        %s488 = scalar_lea.vmem %s251, 4
        %489 = vst [vmem:[%s488] sm:$0xf] %v487
        %s490 = scalar_lea.vmem %s238, 8
        %v491 = vld [vmem:[%s490] sm:$0xf]
        %v492 = vunpack.c.l.bf16 %v491
        %v493 = vld [vmem:[%s2] sm:$0xf]
        %v494 = vld [vmem:[%s2 + $0x4] sm:$0xf]
        %v495 = vld [vmem:[%s2 + $0x8] sm:$0xf]
        %v496 = vld [vmem:[%s2 + $0xc] sm:$0xf]
        %v497 = vld [vmem:[%s2 + $0x10] sm:$0xf]
        %v498 = vld [vmem:[%s2 + $0x14] sm:$0xf]
        %v499 = vld [vmem:[%s2 + $0x18] sm:$0xf]
        %v500 = vld [vmem:[%s2 + $0x1c] sm:$0xf]
        %v501 = vld [vmem:[%s2 + $0x20] sm:$0xf]
        %v502 = vld [vmem:[%s2 + $0x24] sm:$0xf]
        %v503 = vld [vmem:[%s2 + $0x28] sm:$0xf]
        %v504 = vld [vmem:[%s2 + $0x2c] sm:$0xf]
        %v505 = vld [vmem:[%s2 + $0x30] sm:$0xf]
        %v506 = vld [vmem:[%s2 + $0x34] sm:$0xf]
        %v507 = vld [vmem:[%s2 + $0x38] sm:$0xf]
        %v508 = vld [vmem:[%s2 + $0x3c] sm:$0xf]
        %v525 = vunpack.c.l.b16 %v493
        %v526 = vunpack.c.l.b16 %v494
        %v527 = vunpack.c.l.b16 %v495
        %v528 = vunpack.c.l.b16 %v496
        %v529 = vunpack.c.l.b16 %v497
        %v530 = vunpack.c.l.b16 %v498
        %v531 = vunpack.c.l.b16 %v499
        %v532 = vunpack.c.l.b16 %v500
        %v533 = vunpack.c.l.b16 %v501
        %v534 = vunpack.c.l.b16 %v502
        %v535 = vunpack.c.l.b16 %v503
        %v536 = vunpack.c.l.b16 %v504
        %v537 = vunpack.c.l.b16 %v505
        %v538 = vunpack.c.l.b16 %v506
        %v539 = vunpack.c.l.b16 %v507
        %v540 = vunpack.c.l.b16 %v508
        %v541 = vpack.c.b16 %v526, %v525
        %v542 = vpack.c.b16 %v528, %v527
        %v543 = vpack.c.b16 %v530, %v529
        %v544 = vpack.c.b16 %v532, %v531
        %v545 = vpack.c.b16 %v534, %v533
        %v546 = vpack.c.b16 %v536, %v535
        %v547 = vpack.c.b16 %v538, %v537
        %v548 = vpack.c.b16 %v540, %v539
        %557 = vmatprep.subr.bf16.mxu0 0
        %558 = vmatpush1.bf16.msra.mxu0 %v541
        %559 = vmatprep.subr.bf16.mxu0 0
        %560 = vmatpush1.bf16.msra.mxu0 %v542
        %561 = vmatprep.subr.bf16.mxu0 0
        %562 = vmatpush1.bf16.msra.mxu0 %v543
        %563 = vmatprep.subr.bf16.mxu0 0
        %564 = vmatpush1.bf16.msra.mxu0 %v544
        %565 = vmatprep.subr.bf16.mxu0 0
        %566 = vmatpush1.bf16.msra.mxu0 %v545
        %567 = vmatprep.subr.bf16.mxu0 0
        %568 = vmatpush1.bf16.msra.mxu0 %v546
        %569 = vmatprep.subr.bf16.mxu0 0
        %570 = vmatpush1.bf16.msra.mxu0 %v547
        %571 = vmatprep.subr.bf16.mxu0 0
        %572 = vmatpush1.bf16.msra.mxu0 %v548
        %573 = vmatprep.subr.bf16.mxu0 0
        %574 = vmatpush1.bf16.msra.mxu0 0
        %575 = vmatprep.subr.bf16.mxu0 0
        %576 = vmatpush1.bf16.msra.mxu0 0
        %577 = vmatprep.subr.bf16.mxu0 0
        %578 = vmatpush1.bf16.msra.mxu0 0
        %579 = vmatprep.subr.bf16.mxu0 0
        %580 = vmatpush1.bf16.msra.mxu0 0
        %581 = vmatprep.subr.bf16.mxu0 0
        %582 = vmatpush1.bf16.msra.mxu0 0
        %583 = vmatprep.subr.bf16.mxu0 0
        %584 = vmatpush1.bf16.msra.mxu0 0
        %585 = vmatprep.subr.bf16.mxu0 0
        %586 = vmatpush1.bf16.msra.mxu0 0
        %587 = vmatprep.subr.bf16.mxu0 0
        %588 = vmatpush1.bf16.msra.mxu0 0
        %589 = vmatprep.mubr.bf16.mxu0 0
        %590 = vmatmul.mubr.bf16.gmra.mrb[0].mxu0 %v487
        %v591 = vpop.f32.mrb[0].mxu0
        %v592 = vadd.f32 0.0, %v591
        %v593 = vpop.f32.mrb[0].mxu0
        %v594 = vpop.f32.mrb[0].mxu0
        %v595 = vpop.f32.mrb[0].mxu0
        %596 = vdwg.mxu0
        %v597 = vadd.f32 %v492, %v592
        %v598 = vmul.f32 %v486, 0.5
        %v599 = vtanh.pop %v597
        %v600 = vmul.f32 %v599, 0.5
        %v601 = vadd.f32 %v598, %v600
        %v602 = vpack.c.bf16 %v601, %v601
        %s603 = scalar_lea.vmem %s251, 8
        %604 = vst [vmem:[%s603] sm:$0xf] %v602
        %s605 = scalar_lea.vmem %s238, 12
        %v606 = vld [vmem:[%s605] sm:$0xf]
        %v607 = vunpack.c.l.bf16 %v606
        %v608 = vld [vmem:[%s2] sm:$0xf]
        %v609 = vld [vmem:[%s2 + $0x4] sm:$0xf]
        %v610 = vld [vmem:[%s2 + $0x8] sm:$0xf]
        %v611 = vld [vmem:[%s2 + $0xc] sm:$0xf]
        %v612 = vld [vmem:[%s2 + $0x10] sm:$0xf]
        %v613 = vld [vmem:[%s2 + $0x14] sm:$0xf]
        %v614 = vld [vmem:[%s2 + $0x18] sm:$0xf]
        %v615 = vld [vmem:[%s2 + $0x1c] sm:$0xf]
        %v616 = vld [vmem:[%s2 + $0x20] sm:$0xf]
        %v617 = vld [vmem:[%s2 + $0x24] sm:$0xf]
        %v618 = vld [vmem:[%s2 + $0x28] sm:$0xf]
        %v619 = vld [vmem:[%s2 + $0x2c] sm:$0xf]
        %v620 = vld [vmem:[%s2 + $0x30] sm:$0xf]
        %v621 = vld [vmem:[%s2 + $0x34] sm:$0xf]
        %v622 = vld [vmem:[%s2 + $0x38] sm:$0xf]
        %v623 = vld [vmem:[%s2 + $0x3c] sm:$0xf]
        %v640 = vunpack.c.l.b16 %v608
        %v641 = vunpack.c.l.b16 %v609
        %v642 = vunpack.c.l.b16 %v610
        %v643 = vunpack.c.l.b16 %v611
        %v644 = vunpack.c.l.b16 %v612
        %v645 = vunpack.c.l.b16 %v613
        %v646 = vunpack.c.l.b16 %v614
        %v647 = vunpack.c.l.b16 %v615
        %v648 = vunpack.c.l.b16 %v616
        %v649 = vunpack.c.l.b16 %v617
        %v650 = vunpack.c.l.b16 %v618
        %v651 = vunpack.c.l.b16 %v619
        %v652 = vunpack.c.l.b16 %v620
        %v653 = vunpack.c.l.b16 %v621
        %v654 = vunpack.c.l.b16 %v622
        %v655 = vunpack.c.l.b16 %v623
        %v656 = vpack.c.b16 %v641, %v640
        %v657 = vpack.c.b16 %v643, %v642
        %v658 = vpack.c.b16 %v645, %v644
        %v659 = vpack.c.b16 %v647, %v646
        %v660 = vpack.c.b16 %v649, %v648
        %v661 = vpack.c.b16 %v651, %v650
        %v662 = vpack.c.b16 %v653, %v652
        %v663 = vpack.c.b16 %v655, %v654
        %672 = vmatprep.subr.bf16.mxu0 0
        %673 = vmatpush1.bf16.msra.mxu0 %v656
        %674 = vmatprep.subr.bf16.mxu0 0
        %675 = vmatpush1.bf16.msra.mxu0 %v657
        %676 = vmatprep.subr.bf16.mxu0 0
        %677 = vmatpush1.bf16.msra.mxu0 %v658
        %678 = vmatprep.subr.bf16.mxu0 0
        %679 = vmatpush1.bf16.msra.mxu0 %v659
        %680 = vmatprep.subr.bf16.mxu0 0
        %681 = vmatpush1.bf16.msra.mxu0 %v660
        %682 = vmatprep.subr.bf16.mxu0 0
        %683 = vmatpush1.bf16.msra.mxu0 %v661
        %684 = vmatprep.subr.bf16.mxu0 0
        %685 = vmatpush1.bf16.msra.mxu0 %v662
        %686 = vmatprep.subr.bf16.mxu0 0
        %687 = vmatpush1.bf16.msra.mxu0 %v663
        %688 = vmatprep.subr.bf16.mxu0 0
        %689 = vmatpush1.bf16.msra.mxu0 0
        %690 = vmatprep.subr.bf16.mxu0 0
        %691 = vmatpush1.bf16.msra.mxu0 0
        %692 = vmatprep.subr.bf16.mxu0 0
        %693 = vmatpush1.bf16.msra.mxu0 0
        %694 = vmatprep.subr.bf16.mxu0 0
        %695 = vmatpush1.bf16.msra.mxu0 0
        %696 = vmatprep.subr.bf16.mxu0 0
        %697 = vmatpush1.bf16.msra.mxu0 0
        %698 = vmatprep.subr.bf16.mxu0 0
        %699 = vmatpush1.bf16.msra.mxu0 0
        %700 = vmatprep.subr.bf16.mxu0 0
        %701 = vmatpush1.bf16.msra.mxu0 0
        %702 = vmatprep.subr.bf16.mxu0 0
        %703 = vmatpush1.bf16.msra.mxu0 0
        %704 = vmatprep.mubr.bf16.mxu0 0
        %705 = vmatmul.mubr.bf16.gmra.mrb[0].mxu0 %v602
        %v706 = vpop.f32.mrb[0].mxu0
        %v707 = vadd.f32 0.0, %v706
        %v708 = vpop.f32.mrb[0].mxu0
        %v709 = vpop.f32.mrb[0].mxu0
        %v710 = vpop.f32.mrb[0].mxu0
        %711 = vdwg.mxu0
        %v712 = vadd.f32 %v607, %v707
        %v713 = vmul.f32 %v601, 0.5
        %v714 = vtanh.pop %v712
        %v715 = vmul.f32 %v714, 0.5
        %v716 = vadd.f32 %v713, %v715
        %v717 = vpack.c.bf16 %v716, %v716
        %s718 = scalar_lea.vmem %s251, 12
        %719 = vst [vmem:[%s718] sm:$0xf] %v717
        %s720 = scalar_lea.vmem %s238, 16
        %v721 = vld [vmem:[%s720] sm:$0xf]
        %v722 = vunpack.c.l.bf16 %v721
        %v723 = vld [vmem:[%s2] sm:$0xf]
        %v724 = vld [vmem:[%s2 + $0x4] sm:$0xf]
        %v725 = vld [vmem:[%s2 + $0x8] sm:$0xf]
        %v726 = vld [vmem:[%s2 + $0xc] sm:$0xf]
        %v727 = vld [vmem:[%s2 + $0x10] sm:$0xf]
        %v728 = vld [vmem:[%s2 + $0x14] sm:$0xf]
        %v729 = vld [vmem:[%s2 + $0x18] sm:$0xf]
        %v730 = vld [vmem:[%s2 + $0x1c] sm:$0xf]
        %v731 = vld [vmem:[%s2 + $0x20] sm:$0xf]
        %v732 = vld [vmem:[%s2 + $0x24] sm:$0xf]
        %v733 = vld [vmem:[%s2 + $0x28] sm:$0xf]
        %v734 = vld [vmem:[%s2 + $0x2c] sm:$0xf]
        %v735 = vld [vmem:[%s2 + $0x30] sm:$0xf]
        %v736 = vld [vmem:[%s2 + $0x34] sm:$0xf]
        %v737 = vld [vmem:[%s2 + $0x38] sm:$0xf]
        %v738 = vld [vmem:[%s2 + $0x3c] sm:$0xf]
        %v755 = vunpack.c.l.b16 %v723
        %v756 = vunpack.c.l.b16 %v724
        %v757 = vunpack.c.l.b16 %v725
        %v758 = vunpack.c.l.b16 %v726
        %v759 = vunpack.c.l.b16 %v727
        %v760 = vunpack.c.l.b16 %v728
        %v761 = vunpack.c.l.b16 %v729
        %v762 = vunpack.c.l.b16 %v730
        %v763 = vunpack.c.l.b16 %v731
        %v764 = vunpack.c.l.b16 %v732
        %v765 = vunpack.c.l.b16 %v733
        %v766 = vunpack.c.l.b16 %v734
        %v767 = vunpack.c.l.b16 %v735
        %v768 = vunpack.c.l.b16 %v736
        %v769 = vunpack.c.l.b16 %v737
        %v770 = vunpack.c.l.b16 %v738
        %v771 = vpack.c.b16 %v756, %v755
        %v772 = vpack.c.b16 %v758, %v757
        %v773 = vpack.c.b16 %v760, %v759
        %v774 = vpack.c.b16 %v762, %v761
        %v775 = vpack.c.b16 %v764, %v763
        %v776 = vpack.c.b16 %v766, %v765
        %v777 = vpack.c.b16 %v768, %v767
        %v778 = vpack.c.b16 %v770, %v769
        %787 = vmatprep.subr.bf16.mxu0 0
        %788 = vmatpush1.bf16.msra.mxu0 %v771
        %789 = vmatprep.subr.bf16.mxu0 0
        %790 = vmatpush1.bf16.msra.mxu0 %v772
        %791 = vmatprep.subr.bf16.mxu0 0
        %792 = vmatpush1.bf16.msra.mxu0 %v773
        %793 = vmatprep.subr.bf16.mxu0 0
        %794 = vmatpush1.bf16.msra.mxu0 %v774
        %795 = vmatprep.subr.bf16.mxu0 0
        %796 = vmatpush1.bf16.msra.mxu0 %v775
        %797 = vmatprep.subr.bf16.mxu0 0
        %798 = vmatpush1.bf16.msra.mxu0 %v776
        %799 = vmatprep.subr.bf16.mxu0 0
        %800 = vmatpush1.bf16.msra.mxu0 %v777
        %801 = vmatprep.subr.bf16.mxu0 0
        %802 = vmatpush1.bf16.msra.mxu0 %v778
        %803 = vmatprep.subr.bf16.mxu0 0
        %804 = vmatpush1.bf16.msra.mxu0 0
        %805 = vmatprep.subr.bf16.mxu0 0
        %806 = vmatpush1.bf16.msra.mxu0 0
        %807 = vmatprep.subr.bf16.mxu0 0
        %808 = vmatpush1.bf16.msra.mxu0 0
        %809 = vmatprep.subr.bf16.mxu0 0
        %810 = vmatpush1.bf16.msra.mxu0 0
        %811 = vmatprep.subr.bf16.mxu0 0
        %812 = vmatpush1.bf16.msra.mxu0 0
        %813 = vmatprep.subr.bf16.mxu0 0
        %814 = vmatpush1.bf16.msra.mxu0 0
        %815 = vmatprep.subr.bf16.mxu0 0
        %816 = vmatpush1.bf16.msra.mxu0 0
        %817 = vmatprep.subr.bf16.mxu0 0
        %818 = vmatpush1.bf16.msra.mxu0 0
        %819 = vmatprep.mubr.bf16.mxu0 0
        %820 = vmatmul.mubr.bf16.gmra.mrb[0].mxu0 %v717
        %v821 = vpop.f32.mrb[0].mxu0
        %v822 = vadd.f32 0.0, %v821
        %v823 = vpop.f32.mrb[0].mxu0
        %v824 = vpop.f32.mrb[0].mxu0
        %v825 = vpop.f32.mrb[0].mxu0
        %826 = vdwg.mxu0
        %v827 = vadd.f32 %v722, %v822
        %v828 = vmul.f32 %v716, 0.5
        %v829 = vtanh.pop %v827
        %v830 = vmul.f32 %v829, 0.5
        %v831 = vadd.f32 %v828, %v830
        %v832 = vpack.c.bf16 %v831, %v831
        %s833 = scalar_lea.vmem %s251, 16
        %834 = vst [vmem:[%s833] sm:$0xf] %v832
        %s835 = scalar_lea.vmem %s238, 20
        %v836 = vld [vmem:[%s835] sm:$0xf]
        %v837 = vunpack.c.l.bf16 %v836
        %v838 = vld [vmem:[%s2] sm:$0xf]
        %v839 = vld [vmem:[%s2 + $0x4] sm:$0xf]
        %v840 = vld [vmem:[%s2 + $0x8] sm:$0xf]
        %v841 = vld [vmem:[%s2 + $0xc] sm:$0xf]
        %v842 = vld [vmem:[%s2 + $0x10] sm:$0xf]
        %v843 = vld [vmem:[%s2 + $0x14] sm:$0xf]
        %v844 = vld [vmem:[%s2 + $0x18] sm:$0xf]
        %v845 = vld [vmem:[%s2 + $0x1c] sm:$0xf]
        %v846 = vld [vmem:[%s2 + $0x20] sm:$0xf]
        %v847 = vld [vmem:[%s2 + $0x24] sm:$0xf]
        %v848 = vld [vmem:[%s2 + $0x28] sm:$0xf]
        %v849 = vld [vmem:[%s2 + $0x2c] sm:$0xf]
        %v850 = vld [vmem:[%s2 + $0x30] sm:$0xf]
        %v851 = vld [vmem:[%s2 + $0x34] sm:$0xf]
        %v852 = vld [vmem:[%s2 + $0x38] sm:$0xf]
        %v853 = vld [vmem:[%s2 + $0x3c] sm:$0xf]
        %v870 = vunpack.c.l.b16 %v838
        %v871 = vunpack.c.l.b16 %v839
        %v872 = vunpack.c.l.b16 %v840
        %v873 = vunpack.c.l.b16 %v841
        %v874 = vunpack.c.l.b16 %v842
        %v875 = vunpack.c.l.b16 %v843
        %v876 = vunpack.c.l.b16 %v844
        %v877 = vunpack.c.l.b16 %v845
        %v878 = vunpack.c.l.b16 %v846
        %v879 = vunpack.c.l.b16 %v847
        %v880 = vunpack.c.l.b16 %v848
        %v881 = vunpack.c.l.b16 %v849
        %v882 = vunpack.c.l.b16 %v850
        %v883 = vunpack.c.l.b16 %v851
        %v884 = vunpack.c.l.b16 %v852
        %v885 = vunpack.c.l.b16 %v853
        %v886 = vpack.c.b16 %v871, %v870
        %v887 = vpack.c.b16 %v873, %v872
        %v888 = vpack.c.b16 %v875, %v874
        %v889 = vpack.c.b16 %v877, %v876
        %v890 = vpack.c.b16 %v879, %v878
        %v891 = vpack.c.b16 %v881, %v880
        %v892 = vpack.c.b16 %v883, %v882
        %v893 = vpack.c.b16 %v885, %v884
        %902 = vmatprep.subr.bf16.mxu0 0
        %903 = vmatpush1.bf16.msra.mxu0 %v886
        %904 = vmatprep.subr.bf16.mxu0 0
        %905 = vmatpush1.bf16.msra.mxu0 %v887
        %906 = vmatprep.subr.bf16.mxu0 0
        %907 = vmatpush1.bf16.msra.mxu0 %v888
        %908 = vmatprep.subr.bf16.mxu0 0
        %909 = vmatpush1.bf16.msra.mxu0 %v889
        %910 = vmatprep.subr.bf16.mxu0 0
        %911 = vmatpush1.bf16.msra.mxu0 %v890
        %912 = vmatprep.subr.bf16.mxu0 0
        %913 = vmatpush1.bf16.msra.mxu0 %v891
        %914 = vmatprep.subr.bf16.mxu0 0
        %915 = vmatpush1.bf16.msra.mxu0 %v892
        %916 = vmatprep.subr.bf16.mxu0 0
        %917 = vmatpush1.bf16.msra.mxu0 %v893
        %918 = vmatprep.subr.bf16.mxu0 0
        %919 = vmatpush1.bf16.msra.mxu0 0
        %920 = vmatprep.subr.bf16.mxu0 0
        %921 = vmatpush1.bf16.msra.mxu0 0
        %922 = vmatprep.subr.bf16.mxu0 0
        %923 = vmatpush1.bf16.msra.mxu0 0
        %924 = vmatprep.subr.bf16.mxu0 0
        %925 = vmatpush1.bf16.msra.mxu0 0
        %926 = vmatprep.subr.bf16.mxu0 0
        %927 = vmatpush1.bf16.msra.mxu0 0
        %928 = vmatprep.subr.bf16.mxu0 0
        %929 = vmatpush1.bf16.msra.mxu0 0
        %930 = vmatprep.subr.bf16.mxu0 0
        %931 = vmatpush1.bf16.msra.mxu0 0
        %932 = vmatprep.subr.bf16.mxu0 0
        %933 = vmatpush1.bf16.msra.mxu0 0
        %934 = vmatprep.mubr.bf16.mxu0 0
        %935 = vmatmul.mubr.bf16.gmra.mrb[0].mxu0 %v832
        %v936 = vpop.f32.mrb[0].mxu0
        %v937 = vadd.f32 0.0, %v936
        %v938 = vpop.f32.mrb[0].mxu0
        %v939 = vpop.f32.mrb[0].mxu0
        %v940 = vpop.f32.mrb[0].mxu0
        %941 = vdwg.mxu0
        %v942 = vadd.f32 %v837, %v937
        %v943 = vmul.f32 %v831, 0.5
        %v944 = vtanh.pop %v942
        %v945 = vmul.f32 %v944, 0.5
        %v946 = vadd.f32 %v943, %v945
        %v947 = vpack.c.bf16 %v946, %v946
        %s948 = scalar_lea.vmem %s251, 20
        %949 = vst [vmem:[%s948] sm:$0xf] %v947
        %s950 = scalar_lea.vmem %s238, 24
        %v951 = vld [vmem:[%s950] sm:$0xf]
        %v952 = vunpack.c.l.bf16 %v951
        %v953 = vld [vmem:[%s2] sm:$0xf]
        %v954 = vld [vmem:[%s2 + $0x4] sm:$0xf]
        %v955 = vld [vmem:[%s2 + $0x8] sm:$0xf]
        %v956 = vld [vmem:[%s2 + $0xc] sm:$0xf]
        %v957 = vld [vmem:[%s2 + $0x10] sm:$0xf]
        %v958 = vld [vmem:[%s2 + $0x14] sm:$0xf]
        %v959 = vld [vmem:[%s2 + $0x18] sm:$0xf]
        %v960 = vld [vmem:[%s2 + $0x1c] sm:$0xf]
        %v961 = vld [vmem:[%s2 + $0x20] sm:$0xf]
        %v962 = vld [vmem:[%s2 + $0x24] sm:$0xf]
        %v963 = vld [vmem:[%s2 + $0x28] sm:$0xf]
        %v964 = vld [vmem:[%s2 + $0x2c] sm:$0xf]
        %v965 = vld [vmem:[%s2 + $0x30] sm:$0xf]
        %v966 = vld [vmem:[%s2 + $0x34] sm:$0xf]
        %v967 = vld [vmem:[%s2 + $0x38] sm:$0xf]
        %v968 = vld [vmem:[%s2 + $0x3c] sm:$0xf]
        %v985 = vunpack.c.l.b16 %v953
        %v986 = vunpack.c.l.b16 %v954
        %v987 = vunpack.c.l.b16 %v955
        %v988 = vunpack.c.l.b16 %v956
        %v989 = vunpack.c.l.b16 %v957
        %v990 = vunpack.c.l.b16 %v958
        %v991 = vunpack.c.l.b16 %v959
        %v992 = vunpack.c.l.b16 %v960
        %v993 = vunpack.c.l.b16 %v961
        %v994 = vunpack.c.l.b16 %v962
        %v995 = vunpack.c.l.b16 %v963
        %v996 = vunpack.c.l.b16 %v964
        %v997 = vunpack.c.l.b16 %v965
        %v998 = vunpack.c.l.b16 %v966
        %v999 = vunpack.c.l.b16 %v967
        %v1000 = vunpack.c.l.b16 %v968
        %v1001 = vpack.c.b16 %v986, %v985
        %v1002 = vpack.c.b16 %v988, %v987
        %v1003 = vpack.c.b16 %v990, %v989
        %v1004 = vpack.c.b16 %v992, %v991
        %v1005 = vpack.c.b16 %v994, %v993
        %v1006 = vpack.c.b16 %v996, %v995
        %v1007 = vpack.c.b16 %v998, %v997
        %v1008 = vpack.c.b16 %v1000, %v999
        %1017 = vmatprep.subr.bf16.mxu0 0
        %1018 = vmatpush1.bf16.msra.mxu0 %v1001
        %1019 = vmatprep.subr.bf16.mxu0 0
        %1020 = vmatpush1.bf16.msra.mxu0 %v1002
        %1021 = vmatprep.subr.bf16.mxu0 0
        %1022 = vmatpush1.bf16.msra.mxu0 %v1003
        %1023 = vmatprep.subr.bf16.mxu0 0
        %1024 = vmatpush1.bf16.msra.mxu0 %v1004
        %1025 = vmatprep.subr.bf16.mxu0 0
        %1026 = vmatpush1.bf16.msra.mxu0 %v1005
        %1027 = vmatprep.subr.bf16.mxu0 0
        %1028 = vmatpush1.bf16.msra.mxu0 %v1006
        %1029 = vmatprep.subr.bf16.mxu0 0
        %1030 = vmatpush1.bf16.msra.mxu0 %v1007
        %1031 = vmatprep.subr.bf16.mxu0 0
        %1032 = vmatpush1.bf16.msra.mxu0 %v1008
        %1033 = vmatprep.subr.bf16.mxu0 0
        %1034 = vmatpush1.bf16.msra.mxu0 0
        %1035 = vmatprep.subr.bf16.mxu0 0
        %1036 = vmatpush1.bf16.msra.mxu0 0
        %1037 = vmatprep.subr.bf16.mxu0 0
        %1038 = vmatpush1.bf16.msra.mxu0 0
        %1039 = vmatprep.subr.bf16.mxu0 0
        %1040 = vmatpush1.bf16.msra.mxu0 0
        %1041 = vmatprep.subr.bf16.mxu0 0
        %1042 = vmatpush1.bf16.msra.mxu0 0
        %1043 = vmatprep.subr.bf16.mxu0 0
        %1044 = vmatpush1.bf16.msra.mxu0 0
        %1045 = vmatprep.subr.bf16.mxu0 0
        %1046 = vmatpush1.bf16.msra.mxu0 0
        %1047 = vmatprep.subr.bf16.mxu0 0
        %1048 = vmatpush1.bf16.msra.mxu0 0
        %1049 = vmatprep.mubr.bf16.mxu0 0
        %1050 = vmatmul.mubr.bf16.gmra.mrb[0].mxu0 %v947
        %v1051 = vpop.f32.mrb[0].mxu0
        %v1052 = vadd.f32 0.0, %v1051
        %v1053 = vpop.f32.mrb[0].mxu0
        %v1054 = vpop.f32.mrb[0].mxu0
        %v1055 = vpop.f32.mrb[0].mxu0
        %1056 = vdwg.mxu0
        %v1057 = vadd.f32 %v952, %v1052
        %v1058 = vmul.f32 %v946, 0.5
        %v1059 = vtanh.pop %v1057
        %v1060 = vmul.f32 %v1059, 0.5
        %v1061 = vadd.f32 %v1058, %v1060
        %v1062 = vpack.c.bf16 %v1061, %v1061
        %s1063 = scalar_lea.vmem %s251, 24
        %1064 = vst [vmem:[%s1063] sm:$0xf] %v1062
        %s1065 = scalar_lea.vmem %s238, 28
        %v1066 = vld [vmem:[%s1065] sm:$0xf]
        %v1067 = vunpack.c.l.bf16 %v1066
        %v1068 = vld [vmem:[%s2] sm:$0xf]
        %v1069 = vld [vmem:[%s2 + $0x4] sm:$0xf]
        %v1070 = vld [vmem:[%s2 + $0x8] sm:$0xf]
        %v1071 = vld [vmem:[%s2 + $0xc] sm:$0xf]
        %v1072 = vld [vmem:[%s2 + $0x10] sm:$0xf]
        %v1073 = vld [vmem:[%s2 + $0x14] sm:$0xf]
        %v1074 = vld [vmem:[%s2 + $0x18] sm:$0xf]
        %v1075 = vld [vmem:[%s2 + $0x1c] sm:$0xf]
        %v1076 = vld [vmem:[%s2 + $0x20] sm:$0xf]
        %v1077 = vld [vmem:[%s2 + $0x24] sm:$0xf]
        %v1078 = vld [vmem:[%s2 + $0x28] sm:$0xf]
        %v1079 = vld [vmem:[%s2 + $0x2c] sm:$0xf]
        %v1080 = vld [vmem:[%s2 + $0x30] sm:$0xf]
        %v1081 = vld [vmem:[%s2 + $0x34] sm:$0xf]
        %v1082 = vld [vmem:[%s2 + $0x38] sm:$0xf]
        %v1083 = vld [vmem:[%s2 + $0x3c] sm:$0xf]
        %v1100 = vunpack.c.l.b16 %v1068
        %v1101 = vunpack.c.l.b16 %v1069
        %v1102 = vunpack.c.l.b16 %v1070
        %v1103 = vunpack.c.l.b16 %v1071
        %v1104 = vunpack.c.l.b16 %v1072
        %v1105 = vunpack.c.l.b16 %v1073
        %v1106 = vunpack.c.l.b16 %v1074
        %v1107 = vunpack.c.l.b16 %v1075
        %v1108 = vunpack.c.l.b16 %v1076
        %v1109 = vunpack.c.l.b16 %v1077
        %v1110 = vunpack.c.l.b16 %v1078
        %v1111 = vunpack.c.l.b16 %v1079
        %v1112 = vunpack.c.l.b16 %v1080
        %v1113 = vunpack.c.l.b16 %v1081
        %v1114 = vunpack.c.l.b16 %v1082
        %v1115 = vunpack.c.l.b16 %v1083
        %v1116 = vpack.c.b16 %v1101, %v1100
        %v1117 = vpack.c.b16 %v1103, %v1102
        %v1118 = vpack.c.b16 %v1105, %v1104
        %v1119 = vpack.c.b16 %v1107, %v1106
        %v1120 = vpack.c.b16 %v1109, %v1108
        %v1121 = vpack.c.b16 %v1111, %v1110
        %v1122 = vpack.c.b16 %v1113, %v1112
        %v1123 = vpack.c.b16 %v1115, %v1114
        %1132 = vmatprep.subr.bf16.mxu0 0
        %1133 = vmatpush1.bf16.msra.mxu0 %v1116
        %1134 = vmatprep.subr.bf16.mxu0 0
        %1135 = vmatpush1.bf16.msra.mxu0 %v1117
        %1136 = vmatprep.subr.bf16.mxu0 0
        %1137 = vmatpush1.bf16.msra.mxu0 %v1118
        %1138 = vmatprep.subr.bf16.mxu0 0
        %1139 = vmatpush1.bf16.msra.mxu0 %v1119
        %1140 = vmatprep.subr.bf16.mxu0 0
        %1141 = vmatpush1.bf16.msra.mxu0 %v1120
        %1142 = vmatprep.subr.bf16.mxu0 0
        %1143 = vmatpush1.bf16.msra.mxu0 %v1121
        %1144 = vmatprep.subr.bf16.mxu0 0
        %1145 = vmatpush1.bf16.msra.mxu0 %v1122
        %1146 = vmatprep.subr.bf16.mxu0 0
        %1147 = vmatpush1.bf16.msra.mxu0 %v1123
        %1148 = vmatprep.subr.bf16.mxu0 0
        %1149 = vmatpush1.bf16.msra.mxu0 0
        %1150 = vmatprep.subr.bf16.mxu0 0
        %1151 = vmatpush1.bf16.msra.mxu0 0
        %1152 = vmatprep.subr.bf16.mxu0 0
        %1153 = vmatpush1.bf16.msra.mxu0 0
        %1154 = vmatprep.subr.bf16.mxu0 0
        %1155 = vmatpush1.bf16.msra.mxu0 0
        %1156 = vmatprep.subr.bf16.mxu0 0
        %1157 = vmatpush1.bf16.msra.mxu0 0
        %1158 = vmatprep.subr.bf16.mxu0 0
        %1159 = vmatpush1.bf16.msra.mxu0 0
        %1160 = vmatprep.subr.bf16.mxu0 0
        %1161 = vmatpush1.bf16.msra.mxu0 0
        %1162 = vmatprep.subr.bf16.mxu0 0
        %1163 = vmatpush1.bf16.msra.mxu0 0
        %1164 = vmatprep.mubr.bf16.mxu0 0
        %1165 = vmatmul.mubr.bf16.gmra.mrb[0].mxu0 %v1062
        %v1166 = vpop.f32.mrb[0].mxu0
        %v1167 = vadd.f32 0.0, %v1166
        %v1168 = vpop.f32.mrb[0].mxu0
        %v1169 = vpop.f32.mrb[0].mxu0
        %v1170 = vpop.f32.mrb[0].mxu0
        %1171 = vdwg.mxu0
        %v1172 = vadd.f32 %v1067, %v1167
        %v1173 = vmul.f32 %v1061, 0.5
        %v1174 = vtanh.pop %v1172
        %v1175 = vmul.f32 %v1174, 0.5
        %v1176 = vadd.f32 %v1173, %v1175
        %v1177 = vpack.c.bf16 %v1176, %v1176
        %s1178 = scalar_lea.vmem %s251, 28
        %1179 = vst [vmem:[%s1178] sm:$0xf] %v1177
        %1180 = vst [vmem:[#allocation2] sm:$0xff] %v1176
        %s1181 = smul.u32 8, %s22
        %p1182 = scmp.lt.s32.totalorder %s1181, 15
        %s1183 = scalar_select %p1182, %s1181, 15
        %p1184 = scmp.lt.s32.totalorder %s21, 0
        %s1185 = scalar_select %p1184, %s21, 0
        %s1186 = sadd.s32 %s1185, %s1183
        %s1187 = smul.addr %s1186, 4
        %s1188 = scalar_lea.vmem %s3, %s1187
        // Predicated region
        $region37: #{esn_forward_seq.2} parent=31 // pred_check
          %p1189 = pneg %p124
        $region38: #{esn_forward_seq.2} parent=31 // pred_check_branch
          %1191 = sbr.rel (%p1189) target = $region40
        $region39: #{esn_forward_seq.2} parent=31 // pred_region
          %s1192 = smul.u32 8, %s22
        $region40: #{esn_forward_seq.2} parent=31 // pred_fallthru
          _
        // Predicated region
        $region41: #{esn_forward_seq.2} parent=31 // pred_check
          %p1193 = pneg %p150
        $region42: #{esn_forward_seq.2} parent=31 // pred_check_branch
          %1195 = sbr.rel (%p1193) target = $region44
        $region43: #{esn_forward_seq.2} parent=31 // pred_region
          %s1197 = ssub.s32 128, 128
          %1198 = vsyncadd [#allocation3], %s1197
          %s1199 = smul.addr %s21, 128
          %s1200 = scalar_lea.hbm %s4, %s1199
          %s1202 = sshll.u32 [#allocation2], 4
          %s1203 = int_to_ptr.vmem [resolvable:$true] %s1202
          %1205 = dma.vmem_to_hbm [thread:$0]  %s1203, 128, %s1200, [#allocation3]
        $region44: #{esn_forward_seq.2} parent=31 // pred_fallthru
          _
        // Predicated region
        $region45: #{esn_forward_seq.2} parent=31 // pred_check
          %p1206 = pneg %p150
        $region46: #{esn_forward_seq.2} parent=31 // pred_check_branch
          %1208 = sbr.rel (%p1206) target = $region48
        $region47: #{esn_forward_seq.2} parent=31 // pred_region
          %1209 = dma.done [#allocation3], 128
        $region48: #{esn_forward_seq.2} parent=31 // pred_fallthru
          _
      $region32: #{esn_forward_seq.2} parent=5 // pred_fallthru
        _
      %p1210 = scmp.le.s32.totalorder 2, %s12
      // Predicated region
      $region49: #{esn_forward_seq.2} parent=5 // pred_check
        %p1211 = pneg %p1210
      $region50: #{esn_forward_seq.2} parent=5 // pred_check_branch
        %1213 = sbr.rel (%p1211) target = $region52
      $region51: #{esn_forward_seq.2} parent=5 // pred_region
        %s1214 = ssub.s32 %s12, 2
        // Predicated region
        $region53: #{esn_forward_seq.2} parent=51 // pred_check
          %p1215 = pneg %p130
        $region54: #{esn_forward_seq.2} parent=51 // pred_check_branch
          %1217 = sbr.rel (%p1215) target = $region56
        $region55: #{esn_forward_seq.2} parent=51 // pred_region
          %s1218 = smul.u32 8, %s24
          %p1219 = scmp.lt.s32.totalorder %s1218, 15
          %s1220 = scalar_select %p1219, %s1218, 15
          %p1221 = scmp.lt.s32.totalorder %s23, 0
          %s1222 = scalar_select %p1221, %s23, 0
          %s1223 = sadd.s32 %s1222, %s1220
          %s1224 = smul.addr %s1223, 4
          %s1225 = scalar_lea.vmem %s3, %s1224
        $region56: #{esn_forward_seq.2} parent=51 // pred_fallthru
          _
      $region52: #{esn_forward_seq.2} parent=5 // pred_fallthru
        _
    $region6: #{esn_forward_seq.2} parent=1 // loop_footer
      %s16 = sadd.s32 1, %s12
    $region7: #{esn_forward_seq.2} parent=1 // loop_footer_branch
      %11 = sbr.rel target = $region3
    $region8: #{esn_forward_seq.2} parent=1 // loop_exit
      _
    %1226 = vsyncpa [#allocation3], 1
    %s1227 = scalar_lea.sflag [#allocation3], 1
    %1228 = vsyncpa %s1227, 1

</llo_original>
